<compile_context>
chip_gen: v5e
topology: v5e:2x2
jax: 0.10.0
libtpu: 0.0.40
codegen_flags: <defaults>
</compile_context>

<pallas_src>
import functools

import jax
import jax.numpy as jnp
from jax.experimental import pallas as pl
from jax.experimental.pallas import tpu as pltpu


def _round_up(v, m):
    return ((v + m - 1) // m) * m


def _qrets_kernel(x_ref,
                  w1_ref, b1_ref, w2_ref, b2_ref,      # res_fc
                  wp_ref, bp_ref,                      # PQN stand-in
                  w3_ref, b3_ref, w4_ref, b4_ref,      # fc
                  o_ref):
    # x block: (1, L_pad, tile_c) bf16  ->  (L_pad, tile_c)
    x = x_ref[0]

    # res_fc:  relu(W1 @ x + b1) -> W2 @ . + b2     (f32 MXU accumulation)
    h = jnp.dot(w1_ref[...], x, preferred_element_type=jnp.float32) + b1_ref[...]
    h = jnp.maximum(h, 0.0)
    bias = (jnp.dot(w2_ref[...], h.astype(jnp.bfloat16),
                    preferred_element_type=jnp.float32) + b2_ref[...])

    # PQN stand-in: Wp @ x + bp
    pqn = jnp.dot(wp_ref[...], x, preferred_element_type=jnp.float32) + bp_ref[...]

    y = pqn + bias                                            # (P_pad, tile_c)

    # fc: relu(W3 @ y + b3) -> W4 @ . + b4
    h2 = (jnp.dot(w3_ref[...], y.astype(jnp.bfloat16),
                  preferred_element_type=jnp.float32) + b3_ref[...])
    h2 = jnp.maximum(h2, 0.0)
    out = (jnp.dot(w4_ref[...], h2.astype(jnp.bfloat16),
                   preferred_element_type=jnp.float32) + b4_ref[...])

    o_ref[0] = out.astype(o_ref.dtype)


def qrets_forward(x, params, *, tile_c=256):
    """x: (B, L, C) float32. Returns (B, P, C) float32."""
    B, L, C = x.shape
    # Params are in PyTorch nn.Linear layout: w (out_features, in_features), b (out_features,)
    w1, b1, w2, b2, wp, bp, w3, b3, w4, b4 = params
    H = w1.shape[0]
    P = w2.shape[0]

    # Pad contraction / output-feature dims to MXU-friendly multiples of 128;
    # pad channels to the lane tile so output stores are lane-dense.
    L_pad = _round_up(L, 128)
    P_pad = _round_up(P, 128)
    tile_c = min(tile_c, _round_up(C, 128))
    C_pad = _round_up(C, tile_c)

    def prep_w(w, out_pad, in_pad):
        w = jnp.pad(w, ((0, out_pad - w.shape[0]), (0, in_pad - w.shape[1])))
        return w.astype(jnp.bfloat16)

    def prep_b(b, out_pad):
        b = jnp.pad(b, (0, out_pad - b.shape[0]))
        return b.reshape(out_pad, 1).astype(jnp.float32)

    w1p, b1p = prep_w(w1, H, L_pad), prep_b(b1, H)
    w2p, b2p = prep_w(w2, P_pad, H), prep_b(b2, P_pad)
    wpp, bpp = prep_w(wp, P_pad, L_pad), prep_b(bp, P_pad)
    w3p, b3p = prep_w(w3, H, P_pad), prep_b(b3, H)
    w4p, b4p = prep_w(w4, P_pad, H), prep_b(b4, P_pad)

    # No HBM transpose of the activations: x stays (B, L, C); zero-pad + bf16.
    xp = jnp.pad(x, ((0, 0), (0, L_pad - L), (0, C_pad - C))).astype(jnp.bfloat16)

    grid = (B, C_pad // tile_c)

    const = lambda b, j: (0, 0)   # weights/biases: fetched once, VMEM-resident

    out = pl.pallas_call(
        _qrets_kernel,
        out_shape=jax.ShapeDtypeStruct((B, P_pad, C_pad), jnp.float32),
        grid_spec=pltpu.PrefetchScalarGridSpec(
            num_scalar_prefetch=0,
            grid=grid,
            in_specs=[
                pl.BlockSpec((1, L_pad, tile_c), lambda b, j: (b, 0, j)),  # x
                pl.BlockSpec((H, L_pad), const),       # w1
                pl.BlockSpec((H, 1), const),           # b1
                pl.BlockSpec((P_pad, H), const),       # w2
                pl.BlockSpec((P_pad, 1), const),       # b2
                pl.BlockSpec((P_pad, L_pad), const),   # wp
                pl.BlockSpec((P_pad, 1), const),       # bp
                pl.BlockSpec((H, P_pad), const),       # w3
                pl.BlockSpec((H, 1), const),           # b3
                pl.BlockSpec((P_pad, H), const),       # w4
                pl.BlockSpec((P_pad, 1), const),       # b4
            ],
            out_specs=pl.BlockSpec((1, P_pad, tile_c), lambda b, j: (b, 0, j)),
        ),
        compiler_params=pltpu.CompilerParams(
            dimension_semantics=("parallel", "parallel"),
            vmem_limit_bytes=64 * 1024 * 1024),
    )(xp, w1p, b1p, w2p, b2p, wpp, bpp, w3p, b3p, w4p, b4p)

    # Output is already in the PyTorch output layout (B, P, C); just strip pad.
    return out[:, :P, :C]


def init_params(key, seq_len, pred_len):
    # hidden size rule from the module's __init__
    hidden = 256 if pred_len in (96, 192) else 512
    ks = jax.random.split(key, 10)

    def lin(kw, kb, fan_in, fan_out):
        # deterministic uniform init (like torch Linear's kaiming-uniform bound)
        bound = 1.0 / (fan_in ** 0.5)
        w = jax.random.uniform(kw, (fan_out, fan_in), jnp.float32, -bound, bound)
        b = jax.random.uniform(kb, (fan_out,), jnp.float32, -bound, bound)
        return w, b

    w1, b1 = lin(ks[0], ks[1], seq_len, hidden)     # res_fc[0]
    w2, b2 = lin(ks[2], ks[3], hidden, pred_len)    # res_fc[2]
    wp, bp = lin(ks[4], ks[5], seq_len, pred_len)   # PQN stand-in
    w3, b3 = lin(ks[6], ks[7], pred_len, hidden)    # fc[0]
    w4, b4 = lin(ks[8], ks[9], hidden, pred_len)    # fc[2]
    return (w1, b1, w2, b2, wp, bp, w3, b3, w4, b4)


def _reference(x, params):
    """Pure-JAX reference with the same bf16-operand / f32-accumulate math."""
    w1, b1, w2, b2, wp, bp, w3, b3, w4, b4 = params
    bf16 = jnp.bfloat16

    def lin(a, w, b):
        return jnp.dot(a.astype(bf16), w.T.astype(bf16),
                       preferred_element_type=jnp.float32) + b

    xt = jnp.transpose(x, (0, 2, 1))                        # (B, C, L)
    bias = lin(jnp.maximum(lin(xt, w1, b1), 0.0), w2, b2)
    pqn = lin(xt, wp, bp)
    y = pqn + bias
    out = lin(jnp.maximum(lin(y, w3, b3), 0.0), w4, b4)
    return jnp.transpose(out, (0, 2, 1))                    # (B, P, C)


if __name__ == "__main__":
    B, L, C = 2, 8, 4          # batch, seq_len, enc_in
    pred_len = 8               # -> hidden_size = 512

    key = jax.random.PRNGKey(0)
    kx, kp = jax.random.split(key)
    x = jax.random.normal(kx, (B, L, C), jnp.float32)
    params = init_params(kp, L, pred_len)

    fwd = jax.jit(functools.partial(qrets_forward, tile_c=256))
    y = fwd(x, params)
    jax.block_until_ready(y)

    y_ref = _reference(x, params)
    assert y.shape == (B, pred_len, C), y.shape
    assert jnp.allclose(y, y_ref, atol=2e-3, rtol=2e-3), \
        float(jnp.max(jnp.abs(y - y_ref)))

    print("KERNEL_OK")
</pallas_src>

<mosaic_0001>
module attributes {stable_mosaic.version = 11 : i64} {
  func.func @_qrets_kernel(%arg0: i32, %arg1: i32, %arg2: memref<1x128x128xbf16, #tpu.memory_space<vmem>>, %arg3: memref<512x128xbf16, #tpu.memory_space<vmem>>, %arg4: memref<512x1xf32, #tpu.memory_space<vmem>>, %arg5: memref<128x512xbf16, #tpu.memory_space<vmem>>, %arg6: memref<128x1xf32, #tpu.memory_space<vmem>>, %arg7: memref<128x128xbf16, #tpu.memory_space<vmem>>, %arg8: memref<128x1xf32, #tpu.memory_space<vmem>>, %arg9: memref<512x128xbf16, #tpu.memory_space<vmem>>, %arg10: memref<512x1xf32, #tpu.memory_space<vmem>>, %arg11: memref<128x512xbf16, #tpu.memory_space<vmem>>, %arg12: memref<128x1xf32, #tpu.memory_space<vmem>>, %arg13: memref<1x128x128xf32, #tpu.memory_space<vmem>>) attributes {dimension_semantics = [#tpu.dimension_semantics<parallel>, #tpu.dimension_semantics<parallel>], iteration_bounds = array<i64: 2, 1>, scalar_prefetch = 0 : i64, scratch_operands = 0 : i64, tpu.core_type = #tpu.core_type<tc>, window_params = [{transform_indices = @transform_0, window_bounds = array<i64: 1, 128, 128>}, {pipeline_mode = #tpu.pipeline_mode<synchronous>, transform_indices = @transform_1, window_bounds = array<i64: 512, 128>}, {pipeline_mode = #tpu.pipeline_mode<synchronous>, transform_indices = @transform_2, window_bounds = array<i64: 512, 1>}, {pipeline_mode = #tpu.pipeline_mode<synchronous>, transform_indices = @transform_3, window_bounds = array<i64: 128, 512>}, {pipeline_mode = #tpu.pipeline_mode<synchronous>, transform_indices = @transform_4, window_bounds = array<i64: 128, 1>}, {pipeline_mode = #tpu.pipeline_mode<synchronous>, transform_indices = @transform_5, window_bounds = array<i64: 128, 128>}, {pipeline_mode = #tpu.pipeline_mode<synchronous>, transform_indices = @transform_6, window_bounds = array<i64: 128, 1>}, {pipeline_mode = #tpu.pipeline_mode<synchronous>, transform_indices = @transform_7, window_bounds = array<i64: 512, 128>}, {pipeline_mode = #tpu.pipeline_mode<synchronous>, transform_indices = @transform_8, window_bounds = array<i64: 512, 1>}, {pipeline_mode = #tpu.pipeline_mode<synchronous>, transform_indices = @transform_9, window_bounds = array<i64: 128, 512>}, {pipeline_mode = #tpu.pipeline_mode<synchronous>, transform_indices = @transform_10, window_bounds = array<i64: 128, 1>}, {transform_indices = @transform_11, window_bounds = array<i64: 1, 128, 128>}]} {
    %c0 = arith.constant 0 : index
    %c0_0 = arith.constant 0 : index
    %c0_1 = arith.constant 0 : index
    %0 = vector.load %arg2[%c0, %c0_0, %c0_1] : memref<1x128x128xbf16, #tpu.memory_space<vmem>>, vector<1x128x128xbf16>
    %1 = vector.shape_cast %0 : vector<1x128x128xbf16> to vector<128x128xbf16>
    %c0_2 = arith.constant 0 : index
    %c0_3 = arith.constant 0 : index
    %2 = vector.load %arg3[%c0_2, %c0_3] : memref<512x128xbf16, #tpu.memory_space<vmem>>, vector<512x128xbf16>
    %cst = arith.constant dense<0.000000e+00> : vector<512x128xf32>
    %3 = tpu.matmul %2, %1, %cst {dimension_numbers = #tpu.dot_dimension_numbers<[1], [0], [0], [1], [0, 0, 1, 1], [], []>} : vector<512x128xbf16>, vector<128x128xbf16>, vector<512x128xf32> -> vector<512x128xf32>
    %c0_4 = arith.constant 0 : index
    %c0_5 = arith.constant 0 : index
    %4 = vector.load %arg4[%c0_4, %c0_5] : memref<512x1xf32, #tpu.memory_space<vmem>>, vector<512x1xf32>
    %5 = vector.broadcast %4 : vector<512x1xf32> to vector<512x128xf32>
    %6 = arith.addf %3, %5 : vector<512x128xf32>
    %cst_6 = arith.constant 0.000000e+00 : f32
    %7 = vector.broadcast %cst_6 : f32 to vector<512x128xf32>
    %8 = arith.maximumf %6, %7 : vector<512x128xf32>
    %c0_7 = arith.constant 0 : index
    %c0_8 = arith.constant 0 : index
    %9 = vector.load %arg5[%c0_7, %c0_8] : memref<128x512xbf16, #tpu.memory_space<vmem>>, vector<128x512xbf16>
    %10 = arith.truncf %8 : vector<512x128xf32> to vector<512x128xbf16>
    %cst_9 = arith.constant dense<0.000000e+00> : vector<128x128xf32>
    %11 = tpu.matmul %9, %10, %cst_9 {dimension_numbers = #tpu.dot_dimension_numbers<[1], [0], [0], [1], [0, 0, 1, 1], [], []>} : vector<128x512xbf16>, vector<512x128xbf16>, vector<128x128xf32> -> vector<128x128xf32>
    %c0_10 = arith.constant 0 : index
    %c0_11 = arith.constant 0 : index
    %12 = vector.load %arg6[%c0_10, %c0_11] : memref<128x1xf32, #tpu.memory_space<vmem>>, vector<128x1xf32>
    %13 = vector.broadcast %12 : vector<128x1xf32> to vector<128x128xf32>
    %14 = arith.addf %11, %13 : vector<128x128xf32>
    %c0_12 = arith.constant 0 : index
    %c0_13 = arith.constant 0 : index
    %15 = vector.load %arg7[%c0_12, %c0_13] : memref<128x128xbf16, #tpu.memory_space<vmem>>, vector<128x128xbf16>
    %cst_14 = arith.constant dense<0.000000e+00> : vector<128x128xf32>
    %16 = tpu.matmul %15, %1, %cst_14 {dimension_numbers = #tpu.dot_dimension_numbers<[1], [0], [0], [1], [0, 0, 1, 1], [], []>} : vector<128x128xbf16>, vector<128x128xbf16>, vector<128x128xf32> -> vector<128x128xf32>
    %c0_15 = arith.constant 0 : index
    %c0_16 = arith.constant 0 : index
    %17 = vector.load %arg8[%c0_15, %c0_16] : memref<128x1xf32, #tpu.memory_space<vmem>>, vector<128x1xf32>
    %18 = vector.broadcast %17 : vector<128x1xf32> to vector<128x128xf32>
    %19 = arith.addf %16, %18 : vector<128x128xf32>
    %20 = arith.addf %19, %14 : vector<128x128xf32>
    %c0_17 = arith.constant 0 : index
    %c0_18 = arith.constant 0 : index
    %21 = vector.load %arg9[%c0_17, %c0_18] : memref<512x128xbf16, #tpu.memory_space<vmem>>, vector<512x128xbf16>
    %22 = arith.truncf %20 : vector<128x128xf32> to vector<128x128xbf16>
    %cst_19 = arith.constant dense<0.000000e+00> : vector<512x128xf32>
    %23 = tpu.matmul %21, %22, %cst_19 {dimension_numbers = #tpu.dot_dimension_numbers<[1], [0], [0], [1], [0, 0, 1, 1], [], []>} : vector<512x128xbf16>, vector<128x128xbf16>, vector<512x128xf32> -> vector<512x128xf32>
    %c0_20 = arith.constant 0 : index
    %c0_21 = arith.constant 0 : index
    %24 = vector.load %arg10[%c0_20, %c0_21] : memref<512x1xf32, #tpu.memory_space<vmem>>, vector<512x1xf32>
    %25 = vector.broadcast %24 : vector<512x1xf32> to vector<512x128xf32>
    %26 = arith.addf %23, %25 : vector<512x128xf32>
    %cst_22 = arith.constant 0.000000e+00 : f32
    %27 = vector.broadcast %cst_22 : f32 to vector<512x128xf32>
    %28 = arith.maximumf %26, %27 : vector<512x128xf32>
    %c0_23 = arith.constant 0 : index
    %c0_24 = arith.constant 0 : index
    %29 = vector.load %arg11[%c0_23, %c0_24] : memref<128x512xbf16, #tpu.memory_space<vmem>>, vector<128x512xbf16>
    %30 = arith.truncf %28 : vector<512x128xf32> to vector<512x128xbf16>
    %cst_25 = arith.constant dense<0.000000e+00> : vector<128x128xf32>
    %31 = tpu.matmul %29, %30, %cst_25 {dimension_numbers = #tpu.dot_dimension_numbers<[1], [0], [0], [1], [0, 0, 1, 1], [], []>} : vector<128x512xbf16>, vector<512x128xbf16>, vector<128x128xf32> -> vector<128x128xf32>
    %c0_26 = arith.constant 0 : index
    %c0_27 = arith.constant 0 : index
    %32 = vector.load %arg12[%c0_26, %c0_27] : memref<128x1xf32, #tpu.memory_space<vmem>>, vector<128x1xf32>
    %33 = vector.broadcast %32 : vector<128x1xf32> to vector<128x128xf32>
    %34 = arith.addf %31, %33 : vector<128x128xf32>
    %c0_28 = arith.constant 0 : index
    %c0_29 = arith.constant 0 : index
    %c0_30 = arith.constant 0 : index
    %35 = vector.load %arg13[%c0_28, %c0_29, %c0_30] : memref<1x128x128xf32, #tpu.memory_space<vmem>>, vector<1x128x128xf32>
    %36 = vector.shape_cast %35 : vector<1x128x128xf32> to vector<128x128xf32>
    %37 = vector.shape_cast %34 : vector<128x128xf32> to vector<1x128x128xf32>
    tpu.vector_store %arg13[%c0_28, %c0_29, %c0_30], %37 {strides = array<i32>} : memref<1x128x128xf32, #tpu.memory_space<vmem>>, vector<1x128x128xf32>,
    return
  }
  func.func @transform_0(%arg0: i32, %arg1: i32) -> (i32, i32, i32) {
    %c0_i32 = arith.constant 0 : i32
    %c0_i32_0 = arith.constant 0 : i32
    return %arg0, %c0_i32, %arg1 : i32, i32, i32
  }
  func.func @transform_1(%arg0: i32, %arg1: i32) -> (i32, i32) {
    %c0_i32 = arith.constant 0 : i32
    %c0_i32_0 = arith.constant 0 : i32
    %c0_i32_1 = arith.constant 0 : i32
    return %c0_i32, %c0_i32_0 : i32, i32
  }
  func.func @transform_2(%arg0: i32, %arg1: i32) -> (i32, i32) {
    %c0_i32 = arith.constant 0 : i32
    %c0_i32_0 = arith.constant 0 : i32
    %c0_i32_1 = arith.constant 0 : i32
    return %c0_i32, %c0_i32_0 : i32, i32
  }
  func.func @transform_3(%arg0: i32, %arg1: i32) -> (i32, i32) {
    %c0_i32 = arith.constant 0 : i32
    %c0_i32_0 = arith.constant 0 : i32
    %c0_i32_1 = arith.constant 0 : i32
    return %c0_i32, %c0_i32_0 : i32, i32
  }
  func.func @transform_4(%arg0: i32, %arg1: i32) -> (i32, i32) {
    %c0_i32 = arith.constant 0 : i32
    %c0_i32_0 = arith.constant 0 : i32
    %c0_i32_1 = arith.constant 0 : i32
    return %c0_i32, %c0_i32_0 : i32, i32
  }
  func.func @transform_5(%arg0: i32, %arg1: i32) -> (i32, i32) {
    %c0_i32 = arith.constant 0 : i32
    %c0_i32_0 = arith.constant 0 : i32
    %c0_i32_1 = arith.constant 0 : i32
    return %c0_i32, %c0_i32_0 : i32, i32
  }
  func.func @transform_6(%arg0: i32, %arg1: i32) -> (i32, i32) {
    %c0_i32 = arith.constant 0 : i32
    %c0_i32_0 = arith.constant 0 : i32
    %c0_i32_1 = arith.constant 0 : i32
    return %c0_i32, %c0_i32_0 : i32, i32
  }
  func.func @transform_7(%arg0: i32, %arg1: i32) -> (i32, i32) {
    %c0_i32 = arith.constant 0 : i32
    %c0_i32_0 = arith.constant 0 : i32
    %c0_i32_1 = arith.constant 0 : i32
    return %c0_i32, %c0_i32_0 : i32, i32
  }
  func.func @transform_8(%arg0: i32, %arg1: i32) -> (i32, i32) {
    %c0_i32 = arith.constant 0 : i32
    %c0_i32_0 = arith.constant 0 : i32
    %c0_i32_1 = arith.constant 0 : i32
    return %c0_i32, %c0_i32_0 : i32, i32
  }
  func.func @transform_9(%arg0: i32, %arg1: i32) -> (i32, i32) {
    %c0_i32 = arith.constant 0 : i32
    %c0_i32_0 = arith.constant 0 : i32
    %c0_i32_1 = arith.constant 0 : i32
    return %c0_i32, %c0_i32_0 : i32, i32
  }
  func.func @transform_10(%arg0: i32, %arg1: i32) -> (i32, i32) {
    %c0_i32 = arith.constant 0 : i32
    %c0_i32_0 = arith.constant 0 : i32
    %c0_i32_1 = arith.constant 0 : i32
    return %c0_i32, %c0_i32_0 : i32, i32
  }
  func.func @transform_11(%arg0: i32, %arg1: i32) -> (i32, i32, i32) {
    %c0_i32 = arith.constant 0 : i32
    %c0_i32_0 = arith.constant 0 : i32
    return %arg0, %c0_i32, %arg1 : i32, i32, i32
  }
}

</mosaic_0001>

<llo_original>
// kernel: qrets_forward.1
$region0: #{qrets_forward.1}
  #allocation0 [shape = 'u32[]', space=smem, size = 0x4, offset = 0x4, fixed_abs, tag = 'smem constant byte address 0x4 - core index']
  #allocation1 [shape = 'u32[72,128]{1,0:T(1,128)}', space=vmem, size = 0x9000, scoped, tag = 'internal scratch']
  %s0 = inlined_call_operand.vmem [shape: bf16[2,128,128], index: 0, kind: input, shape index: {}]
  %s1 = inlined_call_operand.vmem [shape: bf16[512,128], index: 1, kind: input, shape index: {}]
  %s2 = inlined_call_operand.vmem [shape: f32[512,1], index: 2, kind: input, shape index: {}]
  %s3 = inlined_call_operand.vmem [shape: bf16[128,512], index: 3, kind: input, shape index: {}]
  %s4 = inlined_call_operand.vmem [shape: f32[128,1], index: 4, kind: input, shape index: {}]
  %s5 = inlined_call_operand.vmem [shape: bf16[128,128], index: 5, kind: input, shape index: {}]
  %s6 = inlined_call_operand.vmem [shape: f32[128,1], index: 6, kind: input, shape index: {}]
  %s7 = inlined_call_operand.vmem [shape: bf16[512,128], index: 7, kind: input, shape index: {}]
  %s8 = inlined_call_operand.vmem [shape: f32[512,1], index: 8, kind: input, shape index: {}]
  %s9 = inlined_call_operand.vmem [shape: bf16[128,512], index: 9, kind: input, shape index: {}]
  %s10 = inlined_call_operand.vmem [shape: f32[128,1], index: 10, kind: input, shape index: {}]
  %s11 = inlined_call_operand.vmem [shape: f32[2,128,128], index: 11, kind: output, shape index: {}]
  %s12 = sld [smem:[#allocation0]]
  $region77: #{qrets_forward.1} parent=0
    _
  %s14 = ssub.s32 1, %s12
  %s15 = scalar_select 0, %s14, %s12
  loop: start=0, step=1, limit=4
  $region2: #{qrets_forward.1} parent=0 // loop_pre_header
    _
  $region3: #{qrets_forward.1} parent=0 // loop_header
    %s17 = sphi 0, %s21
    %p18 = scmp.ge.s32.totalorder %s17, 4
    %s24 = sphi 0, %s36
    %s25 = sphi 0, %s32
    %s26 = sphi 0, %s24
    %s27 = sphi 0, %s25
    %s28 = sphi 0, %s26
    %s29 = sphi 0, %s27
    %s41 = sphi 0, %s43
    %s44 = sphi 0, %s41
    %s45 = sphi 0, %s44
    %s61 = sphi 0, %s45
    %s65 = sphi 0, %s65
    %s67 = sphi 0, %s65
    %s68 = sphi 0, %s67
    %s82 = sphi 0, %s68
    %s86 = sphi 0, %s86
    %s88 = sphi 0, %s86
    %s89 = sphi 0, %s88
    %s103 = sphi 0, %s89
    %s107 = sphi 0, %s107
    %s109 = sphi 0, %s107
    %s110 = sphi 0, %s109
    %s124 = sphi 0, %s110
    %s128 = sphi 0, %s128
    %s130 = sphi 0, %s128
    %s131 = sphi 0, %s130
    %s145 = sphi 0, %s131
    %s149 = sphi 0, %s149
    %s151 = sphi 0, %s149
    %s152 = sphi 0, %s151
    %s166 = sphi 0, %s152
    %s170 = sphi 0, %s170
    %s172 = sphi 0, %s170
    %s173 = sphi 0, %s172
    %s187 = sphi 0, %s173
    %s191 = sphi 0, %s191
    %s193 = sphi 0, %s191
    %s194 = sphi 0, %s193
    %s208 = sphi 0, %s194
    %s212 = sphi 0, %s212
    %s214 = sphi 0, %s212
    %s215 = sphi 0, %s214
    %s229 = sphi 0, %s215
    %s233 = sphi 0, %s233
    %s235 = sphi 0, %s233
    %s236 = sphi 0, %s235
    %s250 = sphi 0, %s236
    %s254 = sphi 0, %s254
    %s256 = sphi 0, %s254
    %s257 = sphi 0, %s256
    %s271 = sphi 0, %s257
    %s279 = sphi 0, %s281
    %s282 = sphi 0, %s279
    %s283 = sphi 0, %s282
    %s299 = sphi 0, %s283
  $region4: #{qrets_forward.1} parent=0 // loop_header_branch
    %20 = sbr.rel (%p18) target = $region8
  $region5: #{qrets_forward.1} parent=0 // loop_body
    %s22 = ssub.s32 %s17, 1
    %s23 = ssub.s32 %s17, 2
    %s30 = sadd.s32 1, %s25
    %p31 = scmp.ge.s32.totalorder %s30, 1
    %s32 = scalar_select %p31, 0, %s30
    %s33 = sadd.s32 1, %s24
    %s34 = scalar_select %p31, %s33, %s24
    %p35 = scmp.ge.s32.totalorder %s34, 2
    %s36 = scalar_select %p35, 0, %s34
    %s37 = ssub.s32 %s24, %s36
    %s38 = ssub.s32 %s25, %s32
    %s39 = sor.u32 %s37, %s38
    %p40 = scmp.eq.s32.totalorder %s39, 0
    %s42 = sadd.s32 %s41, 1
    %s43 = scalar_select %p40, %s41, %s42
    %p46 = pneg %p40
    %p47 = scmp.eq.s32.totalorder %s17, 1
    %p48 = por %p46, %p47
    %p49 = scmp.ne.s32.totalorder %s41, %s44
    %p50 = scmp.eq.s32.totalorder %s17, 0
    %p51 = por %p49, %p50
    %p52 = scmp.ne.s32.totalorder %s41, %s44
    %p53 = scmp.eq.s32.totalorder %s22, 1
    %p54 = por %p52, %p53
    %p55 = scmp.ne.s32.totalorder %s44, %s45
    %p56 = scmp.eq.s32.totalorder %s22, 0
    %p57 = por %p55, %p56
    %p58 = scmp.ne.s32.totalorder %s44, %s45
    %p59 = scmp.eq.s32.totalorder %s23, 1
    %p60 = por %p58, %p59
    %p62 = scmp.ne.s32.totalorder %s45, %s61
    %p63 = scmp.eq.s32.totalorder %s23, 0
    %p64 = por %p62, %p63
    %s66 = sadd.s32 %s65, 1
    %p69 = scmp.eq.s32.totalorder %s17, 1
    %p70 = scmp.ne.s32.totalorder %s65, %s67
    %p71 = scmp.eq.s32.totalorder %s17, 0
    %p72 = por %p70, %p71
    %p73 = scmp.ne.s32.totalorder %s65, %s67
    %p74 = scmp.eq.s32.totalorder %s22, 1
    %p75 = por %p73, %p74
    %p76 = scmp.ne.s32.totalorder %s67, %s68
    %p77 = scmp.eq.s32.totalorder %s22, 0
    %p78 = por %p76, %p77
    %p79 = scmp.ne.s32.totalorder %s67, %s68
    %p80 = scmp.eq.s32.totalorder %s23, 1
    %p81 = por %p79, %p80
    %p83 = scmp.ne.s32.totalorder %s68, %s82
    %p84 = scmp.eq.s32.totalorder %s23, 0
    %p85 = por %p83, %p84
    %s87 = sadd.s32 %s86, 1
    %p90 = scmp.eq.s32.totalorder %s17, 1
    %p91 = scmp.ne.s32.totalorder %s86, %s88
    %p92 = scmp.eq.s32.totalorder %s17, 0
    %p93 = por %p91, %p92
    %p94 = scmp.ne.s32.totalorder %s86, %s88
    %p95 = scmp.eq.s32.totalorder %s22, 1
    %p96 = por %p94, %p95
    %p97 = scmp.ne.s32.totalorder %s88, %s89
    %p98 = scmp.eq.s32.totalorder %s22, 0
    %p99 = por %p97, %p98
    %p100 = scmp.ne.s32.totalorder %s88, %s89
    %p101 = scmp.eq.s32.totalorder %s23, 1
    %p102 = por %p100, %p101
    %p104 = scmp.ne.s32.totalorder %s89, %s103
    %p105 = scmp.eq.s32.totalorder %s23, 0
    %p106 = por %p104, %p105
    %s108 = sadd.s32 %s107, 1
    %p111 = scmp.eq.s32.totalorder %s17, 1
    %p112 = scmp.ne.s32.totalorder %s107, %s109
    %p113 = scmp.eq.s32.totalorder %s17, 0
    %p114 = por %p112, %p113
    %p115 = scmp.ne.s32.totalorder %s107, %s109
    %p116 = scmp.eq.s32.totalorder %s22, 1
    %p117 = por %p115, %p116
    %p118 = scmp.ne.s32.totalorder %s109, %s110
    %p119 = scmp.eq.s32.totalorder %s22, 0
    %p120 = por %p118, %p119
    %p121 = scmp.ne.s32.totalorder %s109, %s110
    %p122 = scmp.eq.s32.totalorder %s23, 1
    %p123 = por %p121, %p122
    %p125 = scmp.ne.s32.totalorder %s110, %s124
    %p126 = scmp.eq.s32.totalorder %s23, 0
    %p127 = por %p125, %p126
    %s129 = sadd.s32 %s128, 1
    %p132 = scmp.eq.s32.totalorder %s17, 1
    %p133 = scmp.ne.s32.totalorder %s128, %s130
    %p134 = scmp.eq.s32.totalorder %s17, 0
    %p135 = por %p133, %p134
    %p136 = scmp.ne.s32.totalorder %s128, %s130
    %p137 = scmp.eq.s32.totalorder %s22, 1
    %p138 = por %p136, %p137
    %p139 = scmp.ne.s32.totalorder %s130, %s131
    %p140 = scmp.eq.s32.totalorder %s22, 0
    %p141 = por %p139, %p140
    %p142 = scmp.ne.s32.totalorder %s130, %s131
    %p143 = scmp.eq.s32.totalorder %s23, 1
    %p144 = por %p142, %p143
    %p146 = scmp.ne.s32.totalorder %s131, %s145
    %p147 = scmp.eq.s32.totalorder %s23, 0
    %p148 = por %p146, %p147
    %s150 = sadd.s32 %s149, 1
    %p153 = scmp.eq.s32.totalorder %s17, 1
    %p154 = scmp.ne.s32.totalorder %s149, %s151
    %p155 = scmp.eq.s32.totalorder %s17, 0
    %p156 = por %p154, %p155
    %p157 = scmp.ne.s32.totalorder %s149, %s151
    %p158 = scmp.eq.s32.totalorder %s22, 1
    %p159 = por %p157, %p158
    %p160 = scmp.ne.s32.totalorder %s151, %s152
    %p161 = scmp.eq.s32.totalorder %s22, 0
    %p162 = por %p160, %p161
    %p163 = scmp.ne.s32.totalorder %s151, %s152
    %p164 = scmp.eq.s32.totalorder %s23, 1
    %p165 = por %p163, %p164
    %p167 = scmp.ne.s32.totalorder %s152, %s166
    %p168 = scmp.eq.s32.totalorder %s23, 0
    %p169 = por %p167, %p168
    %s171 = sadd.s32 %s170, 1
    %p174 = scmp.eq.s32.totalorder %s17, 1
    %p175 = scmp.ne.s32.totalorder %s170, %s172
    %p176 = scmp.eq.s32.totalorder %s17, 0
    %p177 = por %p175, %p176
    %p178 = scmp.ne.s32.totalorder %s170, %s172
    %p179 = scmp.eq.s32.totalorder %s22, 1
    %p180 = por %p178, %p179
    %p181 = scmp.ne.s32.totalorder %s172, %s173
    %p182 = scmp.eq.s32.totalorder %s22, 0
    %p183 = por %p181, %p182
    %p184 = scmp.ne.s32.totalorder %s172, %s173
    %p185 = scmp.eq.s32.totalorder %s23, 1
    %p186 = por %p184, %p185
    %p188 = scmp.ne.s32.totalorder %s173, %s187
    %p189 = scmp.eq.s32.totalorder %s23, 0
    %p190 = por %p188, %p189
    %s192 = sadd.s32 %s191, 1
    %p195 = scmp.eq.s32.totalorder %s17, 1
    %p196 = scmp.ne.s32.totalorder %s191, %s193
    %p197 = scmp.eq.s32.totalorder %s17, 0
    %p198 = por %p196, %p197
    %p199 = scmp.ne.s32.totalorder %s191, %s193
    %p200 = scmp.eq.s32.totalorder %s22, 1
    %p201 = por %p199, %p200
    %p202 = scmp.ne.s32.totalorder %s193, %s194
    %p203 = scmp.eq.s32.totalorder %s22, 0
    %p204 = por %p202, %p203
    %p205 = scmp.ne.s32.totalorder %s193, %s194
    %p206 = scmp.eq.s32.totalorder %s23, 1
    %p207 = por %p205, %p206
    %p209 = scmp.ne.s32.totalorder %s194, %s208
    %p210 = scmp.eq.s32.totalorder %s23, 0
    %p211 = por %p209, %p210
    %s213 = sadd.s32 %s212, 1
    %p216 = scmp.eq.s32.totalorder %s17, 1
    %p217 = scmp.ne.s32.totalorder %s212, %s214
    %p218 = scmp.eq.s32.totalorder %s17, 0
    %p219 = por %p217, %p218
    %p220 = scmp.ne.s32.totalorder %s212, %s214
    %p221 = scmp.eq.s32.totalorder %s22, 1
    %p222 = por %p220, %p221
    %p223 = scmp.ne.s32.totalorder %s214, %s215
    %p224 = scmp.eq.s32.totalorder %s22, 0
    %p225 = por %p223, %p224
    %p226 = scmp.ne.s32.totalorder %s214, %s215
    %p227 = scmp.eq.s32.totalorder %s23, 1
    %p228 = por %p226, %p227
    %p230 = scmp.ne.s32.totalorder %s215, %s229
    %p231 = scmp.eq.s32.totalorder %s23, 0
    %p232 = por %p230, %p231
    %s234 = sadd.s32 %s233, 1
    %p237 = scmp.eq.s32.totalorder %s17, 1
    %p238 = scmp.ne.s32.totalorder %s233, %s235
    %p239 = scmp.eq.s32.totalorder %s17, 0
    %p240 = por %p238, %p239
    %p241 = scmp.ne.s32.totalorder %s233, %s235
    %p242 = scmp.eq.s32.totalorder %s22, 1
    %p243 = por %p241, %p242
    %p244 = scmp.ne.s32.totalorder %s235, %s236
    %p245 = scmp.eq.s32.totalorder %s22, 0
    %p246 = por %p244, %p245
    %p247 = scmp.ne.s32.totalorder %s235, %s236
    %p248 = scmp.eq.s32.totalorder %s23, 1
    %p249 = por %p247, %p248
    %p251 = scmp.ne.s32.totalorder %s236, %s250
    %p252 = scmp.eq.s32.totalorder %s23, 0
    %p253 = por %p251, %p252
    %s255 = sadd.s32 %s254, 1
    %p258 = scmp.eq.s32.totalorder %s17, 1
    %p259 = scmp.ne.s32.totalorder %s254, %s256
    %p260 = scmp.eq.s32.totalorder %s17, 0
    %p261 = por %p259, %p260
    %p262 = scmp.ne.s32.totalorder %s254, %s256
    %p263 = scmp.eq.s32.totalorder %s22, 1
    %p264 = por %p262, %p263
    %p265 = scmp.ne.s32.totalorder %s256, %s257
    %p266 = scmp.eq.s32.totalorder %s22, 0
    %p267 = por %p265, %p266
    %p268 = scmp.ne.s32.totalorder %s256, %s257
    %p269 = scmp.eq.s32.totalorder %s23, 1
    %p270 = por %p268, %p269
    %p272 = scmp.ne.s32.totalorder %s257, %s271
    %p273 = scmp.eq.s32.totalorder %s23, 0
    %p274 = por %p272, %p273
    %s275 = ssub.s32 %s24, %s36
    %s276 = ssub.s32 %s25, %s32
    %s277 = sor.u32 %s275, %s276
    %p278 = scmp.eq.s32.totalorder %s277, 0
    %s280 = sadd.s32 %s279, 1
    %s281 = scalar_select %p278, %s279, %s280
    %p284 = pneg %p278
    %p285 = scmp.eq.s32.totalorder %s17, 1
    %p286 = por %p284, %p285
    %p287 = scmp.ne.s32.totalorder %s279, %s282
    %p288 = scmp.eq.s32.totalorder %s17, 0
    %p289 = por %p287, %p288
    %p290 = scmp.ne.s32.totalorder %s279, %s282
    %p291 = scmp.eq.s32.totalorder %s22, 1
    %p292 = por %p290, %p291
    %p293 = scmp.ne.s32.totalorder %s282, %s283
    %p294 = scmp.eq.s32.totalorder %s22, 0
    %p295 = por %p293, %p294
    %p296 = scmp.ne.s32.totalorder %s282, %s283
    %p297 = scmp.eq.s32.totalorder %s23, 1
    %p298 = por %p296, %p297
    %p300 = scmp.ne.s32.totalorder %s283, %s299
    %p301 = scmp.eq.s32.totalorder %s23, 0
    %p302 = por %p300, %p301
    %p303 = scmp.le.s32.totalorder 1, %s17
    %p304 = scmp.lt.s32.totalorder %s17, 3
    %p305 = pnand %p303, %p304
    %p306 = pneg %p305
    // Predicated region
    $region9: #{qrets_forward.1} parent=5 // pred_check
      _
    $region10: #{qrets_forward.1} parent=5 // pred_check_branch
      %308 = sbr.rel (%p305) target = $region12
    $region11: #{qrets_forward.1} parent=5 // pred_region
      %s309 = ssub.s32 %s17, 1
      // Predicated region
      $region13: #{qrets_forward.1} parent=11 // pred_check
        %p310 = pneg %p78
      $region14: #{qrets_forward.1} parent=11 // pred_check_branch
        %312 = sbr.rel (%p310) target = $region16
      $region15: #{qrets_forward.1} parent=11 // pred_region
        _
      $region16: #{qrets_forward.1} parent=11 // pred_fallthru
        _
      // Predicated region
      $region17: #{qrets_forward.1} parent=11 // pred_check
        %p313 = pneg %p99
      $region18: #{qrets_forward.1} parent=11 // pred_check_branch
        %315 = sbr.rel (%p313) target = $region20
      $region19: #{qrets_forward.1} parent=11 // pred_region
        _
      $region20: #{qrets_forward.1} parent=11 // pred_fallthru
        _
      // Predicated region
      $region21: #{qrets_forward.1} parent=11 // pred_check
        %p316 = pneg %p120
      $region22: #{qrets_forward.1} parent=11 // pred_check_branch
        %318 = sbr.rel (%p316) target = $region24
      $region23: #{qrets_forward.1} parent=11 // pred_region
        _
      $region24: #{qrets_forward.1} parent=11 // pred_fallthru
        _
      // Predicated region
      $region25: #{qrets_forward.1} parent=11 // pred_check
        %p319 = pneg %p141
      $region26: #{qrets_forward.1} parent=11 // pred_check_branch
        %321 = sbr.rel (%p319) target = $region28
      $region27: #{qrets_forward.1} parent=11 // pred_region
        _
      $region28: #{qrets_forward.1} parent=11 // pred_fallthru
        _
      // Predicated region
      $region29: #{qrets_forward.1} parent=11 // pred_check
        %p322 = pneg %p162
      $region30: #{qrets_forward.1} parent=11 // pred_check_branch
        %324 = sbr.rel (%p322) target = $region32
      $region31: #{qrets_forward.1} parent=11 // pred_region
        _
      $region32: #{qrets_forward.1} parent=11 // pred_fallthru
        _
      // Predicated region
      $region33: #{qrets_forward.1} parent=11 // pred_check
        %p325 = pneg %p183
      $region34: #{qrets_forward.1} parent=11 // pred_check_branch
        %327 = sbr.rel (%p325) target = $region36
      $region35: #{qrets_forward.1} parent=11 // pred_region
        _
      $region36: #{qrets_forward.1} parent=11 // pred_fallthru
        _
      // Predicated region
      $region37: #{qrets_forward.1} parent=11 // pred_check
        %p328 = pneg %p204
      $region38: #{qrets_forward.1} parent=11 // pred_check_branch
        %330 = sbr.rel (%p328) target = $region40
      $region39: #{qrets_forward.1} parent=11 // pred_region
        _
      $region40: #{qrets_forward.1} parent=11 // pred_fallthru
        _
      // Predicated region
      $region41: #{qrets_forward.1} parent=11 // pred_check
        %p331 = pneg %p225
      $region42: #{qrets_forward.1} parent=11 // pred_check_branch
        %333 = sbr.rel (%p331) target = $region44
      $region43: #{qrets_forward.1} parent=11 // pred_region
        _
      $region44: #{qrets_forward.1} parent=11 // pred_fallthru
        _
      // Predicated region
      $region45: #{qrets_forward.1} parent=11 // pred_check
        %p334 = pneg %p246
      $region46: #{qrets_forward.1} parent=11 // pred_check_branch
        %336 = sbr.rel (%p334) target = $region48
      $region47: #{qrets_forward.1} parent=11 // pred_region
        _
      $region48: #{qrets_forward.1} parent=11 // pred_fallthru
        _
      // Predicated region
      $region49: #{qrets_forward.1} parent=11 // pred_check
        %p337 = pneg %p267
      $region50: #{qrets_forward.1} parent=11 // pred_check_branch
        %339 = sbr.rel (%p337) target = $region52
      $region51: #{qrets_forward.1} parent=11 // pred_region
        _
      $region52: #{qrets_forward.1} parent=11 // pred_fallthru
        _
    $region12: #{qrets_forward.1} parent=5 // pred_fallthru
      _
    %p340 = scmp.lt.s32.totalorder %s17, 2
    // Predicated region
    $region53: #{qrets_forward.1} parent=5 // pred_check
      %p341 = pneg %p340
    $region54: #{qrets_forward.1} parent=5 // pred_check_branch
      %343 = sbr.rel (%p341) target = $region56
    $region55: #{qrets_forward.1} parent=5 // pred_region
      // Predicated region
      $region57: #{qrets_forward.1} parent=55 // pred_check
        %p344 = pneg %p51
      $region58: #{qrets_forward.1} parent=55 // pred_check_branch
        %346 = sbr.rel (%p344) target = $region60
      $region59: #{qrets_forward.1} parent=55 // pred_region
        %p347 = scmp.lt.s32.totalorder %s24, 1
        %s348 = scalar_select %p347, %s24, 1
        %p349 = scmp.lt.s32.totalorder %s25, 0
        %s350 = scalar_select %p349, %s25, 0
        %s351 = smul.addr %s348, 16
        %s352 = sadd.s32 %s350, %s351
        %s353 = smul.addr %s352, 4
        %s354 = scalar_lea.vmem %s0, %s353
      $region60: #{qrets_forward.1} parent=55 // pred_fallthru
        _
    $region56: #{qrets_forward.1} parent=5 // pred_fallthru
      _
    %p355 = scmp.le.s32.totalorder 1, %s17
    %p356 = scmp.lt.s32.totalorder %s17, 3
    %p357 = pnand %p355, %p356
    %p358 = pneg %p357
    // Predicated region
    $region61: #{qrets_forward.1} parent=5 // pred_check
      _
    $region62: #{qrets_forward.1} parent=5 // pred_check_branch
      %360 = sbr.rel (%p357) target = $region64
    $region63: #{qrets_forward.1} parent=5 // pred_region
      %s361 = ssub.s32 %s17, 1
      %p362 = scmp.lt.s32.totalorder %s26, 1
      %s363 = scalar_select %p362, %s26, 1
      %p364 = scmp.lt.s32.totalorder %s27, 0
      %s365 = scalar_select %p364, %s27, 0
      %s366 = smul.addr %s363, 16
      %s367 = sadd.s32 %s365, %s366
      %s368 = smul.addr %s367, 4
      %s369 = scalar_lea.vmem %s0, %s368
      %p370 = pneg %p57
      %p371 = pneg %p54
      %p372 = pneg %p78
      %p373 = pneg %p75
      %p374 = pneg %p99
      %p375 = pneg %p96
      %p376 = pneg %p120
      %p377 = pneg %p117
      %p378 = pneg %p141
      %p379 = pneg %p138
      %p380 = pneg %p162
      %p381 = pneg %p159
      %p382 = pneg %p183
      %p383 = pneg %p180
      %p384 = pneg %p204
      %p385 = pneg %p201
      %p386 = pneg %p225
      %p387 = pneg %p222
      %p388 = pneg %p246
      %p389 = pneg %p243
      %p390 = pneg %p267
      %p391 = pneg %p264
      %p392 = pneg %p295
      %p393 = pneg %p292
      %p394 = scmp.lt.s32.totalorder %s26, 1
      %s395 = scalar_select %p394, %s26, 1
      %p396 = scmp.lt.s32.totalorder %s27, 0
      %s397 = scalar_select %p396, %s27, 0
      %s398 = smul.addr %s395, 16
      %s399 = sadd.s32 %s397, %s398
      %s400 = smul.addr %s399, 8
      %s401 = scalar_lea.vmem %s11, %s400
      %p402 = scmp.lt.s32.totalorder %s26, 1
      %s403 = scalar_select %p402, %s26, 1
      %p404 = scmp.lt.s32.totalorder %s27, 0
      %s405 = scalar_select %p404, %s27, 0
      %s406 = smul.addr %s403, 16
      %s407 = sadd.s32 %s405, %s406
      %s408 = smul.addr %s407, 4
      %s409 = scalar_lea.vmem %s0, %s408
      %p410 = scmp.lt.s32.totalorder %s26, 1
      %s411 = scalar_select %p410, %s26, 1
      %p412 = scmp.lt.s32.totalorder %s27, 0
      %s413 = scalar_select %p412, %s27, 0
      %s414 = smul.addr %s411, 16
      %s415 = sadd.s32 %s413, %s414
      %s416 = smul.addr %s415, 8
      %s417 = scalar_lea.vmem %s11, %s416
      %v418 = vld [vmem:[%s409] sm:$0xf]
      %v419 = vld [vmem:[%s409 + $0x4] sm:$0xf]
      %v420 = vld [vmem:[%s409 + $0x8] sm:$0xf]
      %v421 = vld [vmem:[%s409 + $0xc] sm:$0xf]
      %v422 = vld [vmem:[%s409 + $0x10] sm:$0xf]
      %v423 = vld [vmem:[%s409 + $0x14] sm:$0xf]
      %v424 = vld [vmem:[%s409 + $0x18] sm:$0xf]
      %v425 = vld [vmem:[%s409 + $0x1c] sm:$0xf]
      %v426 = vld [vmem:[%s409 + $0x20] sm:$0xf]
      %v427 = vld [vmem:[%s409 + $0x24] sm:$0xf]
      %v428 = vld [vmem:[%s409 + $0x28] sm:$0xf]
      %v429 = vld [vmem:[%s409 + $0x2c] sm:$0xf]
      %v430 = vld [vmem:[%s409 + $0x30] sm:$0xf]
      %v431 = vld [vmem:[%s409 + $0x34] sm:$0xf]
      %v432 = vld [vmem:[%s409 + $0x38] sm:$0xf]
      %v433 = vld [vmem:[%s409 + $0x3c] sm:$0xf]
      %v434 = vld [vmem:[%s1] sm:$0xf]
      %v435 = vld [vmem:[%s1 + $0x4] sm:$0xf]
      %v436 = vld [vmem:[%s1 + $0x8] sm:$0xf]
      %v437 = vld [vmem:[%s1 + $0xc] sm:$0xf]
      %v438 = vld [vmem:[%s1 + $0x10] sm:$0xf]
      %v439 = vld [vmem:[%s1 + $0x14] sm:$0xf]
      %v440 = vld [vmem:[%s1 + $0x18] sm:$0xf]
      %v441 = vld [vmem:[%s1 + $0x1c] sm:$0xf]
      %v442 = vld [vmem:[%s1 + $0x20] sm:$0xf]
      %v443 = vld [vmem:[%s1 + $0x24] sm:$0xf]
      %v444 = vld [vmem:[%s1 + $0x28] sm:$0xf]
      %v445 = vld [vmem:[%s1 + $0x2c] sm:$0xf]
      %v446 = vld [vmem:[%s1 + $0x30] sm:$0xf]
      %v447 = vld [vmem:[%s1 + $0x34] sm:$0xf]
      %v448 = vld [vmem:[%s1 + $0x38] sm:$0xf]
      %v449 = vld [vmem:[%s1 + $0x3c] sm:$0xf]
      %v450 = vld [vmem:[%s1 + $0x40] sm:$0xf]
      %v451 = vld [vmem:[%s1 + $0x44] sm:$0xf]
      %v452 = vld [vmem:[%s1 + $0x48] sm:$0xf]
      %v453 = vld [vmem:[%s1 + $0x4c] sm:$0xf]
      %v454 = vld [vmem:[%s1 + $0x50] sm:$0xf]
      %v455 = vld [vmem:[%s1 + $0x54] sm:$0xf]
      %v456 = vld [vmem:[%s1 + $0x58] sm:$0xf]
      %v457 = vld [vmem:[%s1 + $0x5c] sm:$0xf]
      %v458 = vld [vmem:[%s1 + $0x60] sm:$0xf]
      %v459 = vld [vmem:[%s1 + $0x64] sm:$0xf]
      %v460 = vld [vmem:[%s1 + $0x68] sm:$0xf]
      %v461 = vld [vmem:[%s1 + $0x6c] sm:$0xf]
      %v462 = vld [vmem:[%s1 + $0x70] sm:$0xf]
      %v463 = vld [vmem:[%s1 + $0x74] sm:$0xf]
      %v464 = vld [vmem:[%s1 + $0x78] sm:$0xf]
      %v465 = vld [vmem:[%s1 + $0x7c] sm:$0xf]
      %v466 = vld [vmem:[%s1 + $0x80] sm:$0xf]
      %v467 = vld [vmem:[%s1 + $0x84] sm:$0xf]
      %v468 = vld [vmem:[%s1 + $0x88] sm:$0xf]
      %v469 = vld [vmem:[%s1 + $0x8c] sm:$0xf]
      %v470 = vld [vmem:[%s1 + $0x90] sm:$0xf]
      %v471 = vld [vmem:[%s1 + $0x94] sm:$0xf]
      %v472 = vld [vmem:[%s1 + $0x98] sm:$0xf]
      %v473 = vld [vmem:[%s1 + $0x9c] sm:$0xf]
      %v474 = vld [vmem:[%s1 + $0xa0] sm:$0xf]
      %v475 = vld [vmem:[%s1 + $0xa4] sm:$0xf]
      %v476 = vld [vmem:[%s1 + $0xa8] sm:$0xf]
      %v477 = vld [vmem:[%s1 + $0xac] sm:$0xf]
      %v478 = vld [vmem:[%s1 + $0xb0] sm:$0xf]
      %v479 = vld [vmem:[%s1 + $0xb4] sm:$0xf]
      %v480 = vld [vmem:[%s1 + $0xb8] sm:$0xf]
      %v481 = vld [vmem:[%s1 + $0xbc] sm:$0xf]
      %v482 = vld [vmem:[%s1 + $0xc0] sm:$0xf]
      %v483 = vld [vmem:[%s1 + $0xc4] sm:$0xf]
      %v484 = vld [vmem:[%s1 + $0xc8] sm:$0xf]
      %v485 = vld [vmem:[%s1 + $0xcc] sm:$0xf]
      %v486 = vld [vmem:[%s1 + $0xd0] sm:$0xf]
      %v487 = vld [vmem:[%s1 + $0xd4] sm:$0xf]
      %v488 = vld [vmem:[%s1 + $0xd8] sm:$0xf]
      %v489 = vld [vmem:[%s1 + $0xdc] sm:$0xf]
      %v490 = vld [vmem:[%s1 + $0xe0] sm:$0xf]
      %v491 = vld [vmem:[%s1 + $0xe4] sm:$0xf]
      %v492 = vld [vmem:[%s1 + $0xe8] sm:$0xf]
      %v493 = vld [vmem:[%s1 + $0xec] sm:$0xf]
      %v494 = vld [vmem:[%s1 + $0xf0] sm:$0xf]
      %v495 = vld [vmem:[%s1 + $0xf4] sm:$0xf]
      %v496 = vld [vmem:[%s1 + $0xf8] sm:$0xf]
      %v497 = vld [vmem:[%s1 + $0xfc] sm:$0xf]
      %v498 = vld [vmem:[%s2] sm:$0xff]
      %v499 = vld [vmem:[%s2 + $0x8] sm:$0xff]
      %v500 = vld [vmem:[%s2 + $0x10] sm:$0xff]
      %v501 = vld [vmem:[%s2 + $0x18] sm:$0xff]
      %v502 = vld [vmem:[%s2 + $0x20] sm:$0xff]
      %v503 = vld [vmem:[%s2 + $0x28] sm:$0xff]
      %v504 = vld [vmem:[%s2 + $0x30] sm:$0xff]
      %v505 = vld [vmem:[%s2 + $0x38] sm:$0xff]
      %v506 = vld [vmem:[%s2 + $0x40] sm:$0xff]
      %v507 = vld [vmem:[%s2 + $0x48] sm:$0xff]
      %v508 = vld [vmem:[%s2 + $0x50] sm:$0xff]
      %v509 = vld [vmem:[%s2 + $0x58] sm:$0xff]
      %v510 = vld [vmem:[%s2 + $0x60] sm:$0xff]
      %v511 = vld [vmem:[%s2 + $0x68] sm:$0xff]
      %v512 = vld [vmem:[%s2 + $0x70] sm:$0xff]
      %v513 = vld [vmem:[%s2 + $0x78] sm:$0xff]
      %v514 = vld [vmem:[%s2 + $0x80] sm:$0xff]
      %v515 = vld [vmem:[%s2 + $0x88] sm:$0xff]
      %v516 = vld [vmem:[%s2 + $0x90] sm:$0xff]
      %v517 = vld [vmem:[%s2 + $0x98] sm:$0xff]
      %v518 = vld [vmem:[%s2 + $0xa0] sm:$0xff]
      %v519 = vld [vmem:[%s2 + $0xa8] sm:$0xff]
      %v520 = vld [vmem:[%s2 + $0xb0] sm:$0xff]
      %v521 = vld [vmem:[%s2 + $0xb8] sm:$0xff]
      %v522 = vld [vmem:[%s2 + $0xc0] sm:$0xff]
      %v523 = vld [vmem:[%s2 + $0xc8] sm:$0xff]
      %v524 = vld [vmem:[%s2 + $0xd0] sm:$0xff]
      %v525 = vld [vmem:[%s2 + $0xd8] sm:$0xff]
      %v526 = vld [vmem:[%s2 + $0xe0] sm:$0xff]
      %v527 = vld [vmem:[%s2 + $0xe8] sm:$0xff]
      %v528 = vld [vmem:[%s2 + $0xf0] sm:$0xff]
      %v529 = vld [vmem:[%s2 + $0xf8] sm:$0xff]
      %v530 = vld [vmem:[%s2 + $0x100] sm:$0xff]
      %v531 = vld [vmem:[%s2 + $0x108] sm:$0xff]
      %v532 = vld [vmem:[%s2 + $0x110] sm:$0xff]
      %v533 = vld [vmem:[%s2 + $0x118] sm:$0xff]
      %v534 = vld [vmem:[%s2 + $0x120] sm:$0xff]
      %v535 = vld [vmem:[%s2 + $0x128] sm:$0xff]
      %v536 = vld [vmem:[%s2 + $0x130] sm:$0xff]
      %v537 = vld [vmem:[%s2 + $0x138] sm:$0xff]
      %v538 = vld [vmem:[%s2 + $0x140] sm:$0xff]
      %v539 = vld [vmem:[%s2 + $0x148] sm:$0xff]
      %v540 = vld [vmem:[%s2 + $0x150] sm:$0xff]
      %v541 = vld [vmem:[%s2 + $0x158] sm:$0xff]
      %v542 = vld [vmem:[%s2 + $0x160] sm:$0xff]
      %v543 = vld [vmem:[%s2 + $0x168] sm:$0xff]
      %v544 = vld [vmem:[%s2 + $0x170] sm:$0xff]
      %v545 = vld [vmem:[%s2 + $0x178] sm:$0xff]
      %v546 = vld [vmem:[%s2 + $0x180] sm:$0xff]
      %v547 = vld [vmem:[%s2 + $0x188] sm:$0xff]
      %v548 = vld [vmem:[%s2 + $0x190] sm:$0xff]
      %v549 = vld [vmem:[%s2 + $0x198] sm:$0xff]
      %v550 = vld [vmem:[%s2 + $0x1a0] sm:$0xff]
      %v551 = vld [vmem:[%s2 + $0x1a8] sm:$0xff]
      %v552 = vld [vmem:[%s2 + $0x1b0] sm:$0xff]
      %v553 = vld [vmem:[%s2 + $0x1b8] sm:$0xff]
      %v554 = vld [vmem:[%s2 + $0x1c0] sm:$0xff]
      %v555 = vld [vmem:[%s2 + $0x1c8] sm:$0xff]
      %v556 = vld [vmem:[%s2 + $0x1d0] sm:$0xff]
      %v557 = vld [vmem:[%s2 + $0x1d8] sm:$0xff]
      %v558 = vld [vmem:[%s2 + $0x1e0] sm:$0xff]
      %v559 = vld [vmem:[%s2 + $0x1e8] sm:$0xff]
      %v560 = vld [vmem:[%s2 + $0x1f0] sm:$0xff]
      %v561 = vld [vmem:[%s2 + $0x1f8] sm:$0xff]
      %563 = vset.pattern.permute.xlu0 0
      %564 = vperm.xlu0 %563, %v498
      %v565 = vpop.permute.xlu0 %564
      %568 = vset.pattern.permute.xlu0 0
      %569 = vperm.xlu0 %568, %v499
      %v570 = vpop.permute.xlu0 %569
      %573 = vset.pattern.permute.xlu0 0
      %574 = vperm.xlu0 %573, %v500
      %v575 = vpop.permute.xlu0 %574
      %578 = vset.pattern.permute.xlu0 0
      %579 = vperm.xlu0 %578, %v501
      %v580 = vpop.permute.xlu0 %579
      %583 = vset.pattern.permute.xlu0 0
      %584 = vperm.xlu0 %583, %v502
      %v585 = vpop.permute.xlu0 %584
      %588 = vset.pattern.permute.xlu0 0
      %589 = vperm.xlu0 %588, %v503
      %v590 = vpop.permute.xlu0 %589
      %593 = vset.pattern.permute.xlu0 0
      %594 = vperm.xlu0 %593, %v504
      %v595 = vpop.permute.xlu0 %594
      %598 = vset.pattern.permute.xlu0 0
      %599 = vperm.xlu0 %598, %v505
      %v600 = vpop.permute.xlu0 %599
      %603 = vset.pattern.permute.xlu0 0
      %604 = vperm.xlu0 %603, %v506
      %v605 = vpop.permute.xlu0 %604
      %608 = vset.pattern.permute.xlu0 0
      %609 = vperm.xlu0 %608, %v507
      %v610 = vpop.permute.xlu0 %609
      %613 = vset.pattern.permute.xlu0 0
      %614 = vperm.xlu0 %613, %v508
      %v615 = vpop.permute.xlu0 %614
      %618 = vset.pattern.permute.xlu0 0
      %619 = vperm.xlu0 %618, %v509
      %v620 = vpop.permute.xlu0 %619
      %623 = vset.pattern.permute.xlu0 0
      %624 = vperm.xlu0 %623, %v510
      %v625 = vpop.permute.xlu0 %624
      %628 = vset.pattern.permute.xlu0 0
      %629 = vperm.xlu0 %628, %v511
      %v630 = vpop.permute.xlu0 %629
      %633 = vset.pattern.permute.xlu0 0
      %634 = vperm.xlu0 %633, %v512
      %v635 = vpop.permute.xlu0 %634
      %638 = vset.pattern.permute.xlu0 0
      %639 = vperm.xlu0 %638, %v513
      %v640 = vpop.permute.xlu0 %639
      %643 = vset.pattern.permute.xlu0 0
      %644 = vperm.xlu0 %643, %v514
      %v645 = vpop.permute.xlu0 %644
      %648 = vset.pattern.permute.xlu0 0
      %649 = vperm.xlu0 %648, %v515
      %v650 = vpop.permute.xlu0 %649
      %653 = vset.pattern.permute.xlu0 0
      %654 = vperm.xlu0 %653, %v516
      %v655 = vpop.permute.xlu0 %654
      %658 = vset.pattern.permute.xlu0 0
      %659 = vperm.xlu0 %658, %v517
      %v660 = vpop.permute.xlu0 %659
      %663 = vset.pattern.permute.xlu0 0
      %664 = vperm.xlu0 %663, %v518
      %v665 = vpop.permute.xlu0 %664
      %668 = vset.pattern.permute.xlu0 0
      %669 = vperm.xlu0 %668, %v519
      %v670 = vpop.permute.xlu0 %669
      %673 = vset.pattern.permute.xlu0 0
      %674 = vperm.xlu0 %673, %v520
      %v675 = vpop.permute.xlu0 %674
      %678 = vset.pattern.permute.xlu0 0
      %679 = vperm.xlu0 %678, %v521
      %v680 = vpop.permute.xlu0 %679
      %683 = vset.pattern.permute.xlu0 0
      %684 = vperm.xlu0 %683, %v522
      %v685 = vpop.permute.xlu0 %684
      %688 = vset.pattern.permute.xlu0 0
      %689 = vperm.xlu0 %688, %v523
      %v690 = vpop.permute.xlu0 %689
      %693 = vset.pattern.permute.xlu0 0
      %694 = vperm.xlu0 %693, %v524
      %v695 = vpop.permute.xlu0 %694
      %698 = vset.pattern.permute.xlu0 0
      %699 = vperm.xlu0 %698, %v525
      %v700 = vpop.permute.xlu0 %699
      %703 = vset.pattern.permute.xlu0 0
      %704 = vperm.xlu0 %703, %v526
      %v705 = vpop.permute.xlu0 %704
      %708 = vset.pattern.permute.xlu0 0
      %709 = vperm.xlu0 %708, %v527
      %v710 = vpop.permute.xlu0 %709
      %713 = vset.pattern.permute.xlu0 0
      %714 = vperm.xlu0 %713, %v528
      %v715 = vpop.permute.xlu0 %714
      %718 = vset.pattern.permute.xlu0 0
      %719 = vperm.xlu0 %718, %v529
      %v720 = vpop.permute.xlu0 %719
      %723 = vset.pattern.permute.xlu0 0
      %724 = vperm.xlu0 %723, %v530
      %v725 = vpop.permute.xlu0 %724
      %728 = vset.pattern.permute.xlu0 0
      %729 = vperm.xlu0 %728, %v531
      %v730 = vpop.permute.xlu0 %729
      %733 = vset.pattern.permute.xlu0 0
      %734 = vperm.xlu0 %733, %v532
      %v735 = vpop.permute.xlu0 %734
      %738 = vset.pattern.permute.xlu0 0
      %739 = vperm.xlu0 %738, %v533
      %v740 = vpop.permute.xlu0 %739
      %743 = vset.pattern.permute.xlu0 0
      %744 = vperm.xlu0 %743, %v534
      %v745 = vpop.permute.xlu0 %744
      %748 = vset.pattern.permute.xlu0 0
      %749 = vperm.xlu0 %748, %v535
      %v750 = vpop.permute.xlu0 %749
      %753 = vset.pattern.permute.xlu0 0
      %754 = vperm.xlu0 %753, %v536
      %v755 = vpop.permute.xlu0 %754
      %758 = vset.pattern.permute.xlu0 0
      %759 = vperm.xlu0 %758, %v537
      %v760 = vpop.permute.xlu0 %759
      %763 = vset.pattern.permute.xlu0 0
      %764 = vperm.xlu0 %763, %v538
      %v765 = vpop.permute.xlu0 %764
      %768 = vset.pattern.permute.xlu0 0
      %769 = vperm.xlu0 %768, %v539
      %v770 = vpop.permute.xlu0 %769
      %773 = vset.pattern.permute.xlu0 0
      %774 = vperm.xlu0 %773, %v540
      %v775 = vpop.permute.xlu0 %774
      %778 = vset.pattern.permute.xlu0 0
      %779 = vperm.xlu0 %778, %v541
      %v780 = vpop.permute.xlu0 %779
      %783 = vset.pattern.permute.xlu0 0
      %784 = vperm.xlu0 %783, %v542
      %v785 = vpop.permute.xlu0 %784
      %788 = vset.pattern.permute.xlu0 0
      %789 = vperm.xlu0 %788, %v543
      %v790 = vpop.permute.xlu0 %789
      %793 = vset.pattern.permute.xlu0 0
      %794 = vperm.xlu0 %793, %v544
      %v795 = vpop.permute.xlu0 %794
      %798 = vset.pattern.permute.xlu0 0
      %799 = vperm.xlu0 %798, %v545
      %v800 = vpop.permute.xlu0 %799
      %803 = vset.pattern.permute.xlu0 0
      %804 = vperm.xlu0 %803, %v546
      %v805 = vpop.permute.xlu0 %804
      %808 = vset.pattern.permute.xlu0 0
      %809 = vperm.xlu0 %808, %v547
      %v810 = vpop.permute.xlu0 %809
      %813 = vset.pattern.permute.xlu0 0
      %814 = vperm.xlu0 %813, %v548
      %v815 = vpop.permute.xlu0 %814
      %818 = vset.pattern.permute.xlu0 0
      %819 = vperm.xlu0 %818, %v549
      %v820 = vpop.permute.xlu0 %819
      %823 = vset.pattern.permute.xlu0 0
      %824 = vperm.xlu0 %823, %v550
      %v825 = vpop.permute.xlu0 %824
      %828 = vset.pattern.permute.xlu0 0
      %829 = vperm.xlu0 %828, %v551
      %v830 = vpop.permute.xlu0 %829
      %833 = vset.pattern.permute.xlu0 0
      %834 = vperm.xlu0 %833, %v552
      %v835 = vpop.permute.xlu0 %834
      %838 = vset.pattern.permute.xlu0 0
      %839 = vperm.xlu0 %838, %v553
      %v840 = vpop.permute.xlu0 %839
      %843 = vset.pattern.permute.xlu0 0
      %844 = vperm.xlu0 %843, %v554
      %v845 = vpop.permute.xlu0 %844
      %848 = vset.pattern.permute.xlu0 0
      %849 = vperm.xlu0 %848, %v555
      %v850 = vpop.permute.xlu0 %849
      %853 = vset.pattern.permute.xlu0 0
      %854 = vperm.xlu0 %853, %v556
      %v855 = vpop.permute.xlu0 %854
      %858 = vset.pattern.permute.xlu0 0
      %859 = vperm.xlu0 %858, %v557
      %v860 = vpop.permute.xlu0 %859
      %863 = vset.pattern.permute.xlu0 0
      %864 = vperm.xlu0 %863, %v558
      %v865 = vpop.permute.xlu0 %864
      %868 = vset.pattern.permute.xlu0 0
      %869 = vperm.xlu0 %868, %v559
      %v870 = vpop.permute.xlu0 %869
      %873 = vset.pattern.permute.xlu0 0
      %874 = vperm.xlu0 %873, %v560
      %v875 = vpop.permute.xlu0 %874
      %878 = vset.pattern.permute.xlu0 0
      %879 = vperm.xlu0 %878, %v561
      %v880 = vpop.permute.xlu0 %879
      %v946 = vunpack.c.l.b16 %v434
      %v947 = vunpack.c.l.b16 %v435
      %v948 = vunpack.c.l.b16 %v436
      %v949 = vunpack.c.l.b16 %v437
      %v950 = vunpack.c.l.b16 %v438
      %v951 = vunpack.c.l.b16 %v439
      %v952 = vunpack.c.l.b16 %v440
      %v953 = vunpack.c.l.b16 %v441
      %v954 = vunpack.c.l.b16 %v442
      %v955 = vunpack.c.l.b16 %v443
      %v956 = vunpack.c.l.b16 %v444
      %v957 = vunpack.c.l.b16 %v445
      %v958 = vunpack.c.l.b16 %v446
      %v959 = vunpack.c.l.b16 %v447
      %v960 = vunpack.c.l.b16 %v448
      %v961 = vunpack.c.l.b16 %v449
      %v962 = vunpack.c.l.b16 %v450
      %v963 = vunpack.c.l.b16 %v451
      %v964 = vunpack.c.l.b16 %v452
      %v965 = vunpack.c.l.b16 %v453
      %v966 = vunpack.c.l.b16 %v454
      %v967 = vunpack.c.l.b16 %v455
      %v968 = vunpack.c.l.b16 %v456
      %v969 = vunpack.c.l.b16 %v457
      %v970 = vunpack.c.l.b16 %v458
      %v971 = vunpack.c.l.b16 %v459
      %v972 = vunpack.c.l.b16 %v460
      %v973 = vunpack.c.l.b16 %v461
      %v974 = vunpack.c.l.b16 %v462
      %v975 = vunpack.c.l.b16 %v463
      %v976 = vunpack.c.l.b16 %v464
      %v977 = vunpack.c.l.b16 %v465
      %v978 = vunpack.c.l.b16 %v466
      %v979 = vunpack.c.l.b16 %v467
      %v980 = vunpack.c.l.b16 %v468
      %v981 = vunpack.c.l.b16 %v469
      %v982 = vunpack.c.l.b16 %v470
      %v983 = vunpack.c.l.b16 %v471
      %v984 = vunpack.c.l.b16 %v472
      %v985 = vunpack.c.l.b16 %v473
      %v986 = vunpack.c.l.b16 %v474
      %v987 = vunpack.c.l.b16 %v475
      %v988 = vunpack.c.l.b16 %v476
      %v989 = vunpack.c.l.b16 %v477
      %v990 = vunpack.c.l.b16 %v478
      %v991 = vunpack.c.l.b16 %v479
      %v992 = vunpack.c.l.b16 %v480
      %v993 = vunpack.c.l.b16 %v481
      %v994 = vunpack.c.l.b16 %v482
      %v995 = vunpack.c.l.b16 %v483
      %v996 = vunpack.c.l.b16 %v484
      %v997 = vunpack.c.l.b16 %v485
      %v998 = vunpack.c.l.b16 %v486
      %v999 = vunpack.c.l.b16 %v487
      %v1000 = vunpack.c.l.b16 %v488
      %v1001 = vunpack.c.l.b16 %v489
      %v1002 = vunpack.c.l.b16 %v490
      %v1003 = vunpack.c.l.b16 %v491
      %v1004 = vunpack.c.l.b16 %v492
      %v1005 = vunpack.c.l.b16 %v493
      %v1006 = vunpack.c.l.b16 %v494
      %v1007 = vunpack.c.l.b16 %v495
      %v1008 = vunpack.c.l.b16 %v496
      %v1009 = vunpack.c.l.b16 %v497
      %v1010 = vpack.c.b16 %v947, %v946
      %v1011 = vpack.c.b16 %v949, %v948
      %v1012 = vpack.c.b16 %v951, %v950
      %v1013 = vpack.c.b16 %v953, %v952
      %v1014 = vpack.c.b16 %v955, %v954
      %v1015 = vpack.c.b16 %v957, %v956
      %v1016 = vpack.c.b16 %v959, %v958
      %v1017 = vpack.c.b16 %v961, %v960
      %v1018 = vpack.c.b16 %v963, %v962
      %v1019 = vpack.c.b16 %v965, %v964
      %v1020 = vpack.c.b16 %v967, %v966
      %v1021 = vpack.c.b16 %v969, %v968
      %v1022 = vpack.c.b16 %v971, %v970
      %v1023 = vpack.c.b16 %v973, %v972
      %v1024 = vpack.c.b16 %v975, %v974
      %v1025 = vpack.c.b16 %v977, %v976
      %v1026 = vpack.c.b16 %v979, %v978
      %v1027 = vpack.c.b16 %v981, %v980
      %v1028 = vpack.c.b16 %v983, %v982
      %v1029 = vpack.c.b16 %v985, %v984
      %v1030 = vpack.c.b16 %v987, %v986
      %v1031 = vpack.c.b16 %v989, %v988
      %v1032 = vpack.c.b16 %v991, %v990
      %v1033 = vpack.c.b16 %v993, %v992
      %v1034 = vpack.c.b16 %v995, %v994
      %v1035 = vpack.c.b16 %v997, %v996
      %v1036 = vpack.c.b16 %v999, %v998
      %v1037 = vpack.c.b16 %v1001, %v1000
      %v1038 = vpack.c.b16 %v1003, %v1002
      %v1039 = vpack.c.b16 %v1005, %v1004
      %v1040 = vpack.c.b16 %v1007, %v1006
      %v1041 = vpack.c.b16 %v1009, %v1008
      %v1090 = vunpack.c.l.b16 %v418
      %v1091 = vunpack.c.l.b16 %v419
      %v1092 = vunpack.c.l.b16 %v420
      %v1093 = vunpack.c.l.b16 %v421
      %v1094 = vunpack.c.l.b16 %v422
      %v1095 = vunpack.c.l.b16 %v423
      %v1096 = vunpack.c.l.b16 %v424
      %v1097 = vunpack.c.l.b16 %v425
      %v1098 = vunpack.c.l.b16 %v426
      %v1099 = vunpack.c.l.b16 %v427
      %v1100 = vunpack.c.l.b16 %v428
      %v1101 = vunpack.c.l.b16 %v429
      %v1102 = vunpack.c.l.b16 %v430
      %v1103 = vunpack.c.l.b16 %v431
      %v1104 = vunpack.c.l.b16 %v432
      %v1105 = vunpack.c.l.b16 %v433
      %v1106 = vpack.c.b16 %v1091, %v1090
      %v1107 = vpack.c.b16 %v1093, %v1092
      %v1108 = vpack.c.b16 %v1095, %v1094
      %v1109 = vpack.c.b16 %v1097, %v1096
      %v1110 = vpack.c.b16 %v1099, %v1098
      %v1111 = vpack.c.b16 %v1101, %v1100
      %v1112 = vpack.c.b16 %v1103, %v1102
      %v1113 = vpack.c.b16 %v1105, %v1104
      %1122 = vmatpush.bf16.msra.mxu0 %v1113
      %1123 = vmatpush.bf16.msra.mxu0 %v1112
      %1124 = vmatpush.bf16.msra.mxu0 %v1111
      %1125 = vmatpush.bf16.msra.mxu0 %v1110
      %1126 = vmatpush.bf16.msra.mxu0 %v1109
      %1127 = vmatpush.bf16.msra.mxu0 %v1108
      %1128 = vmatpush.bf16.msra.mxu0 %v1107
      %1129 = vmatpush.bf16.msra.mxu0 %v1106
      %1130 = vmatmul.bf16.gmra.mxu0 %v1010
      %v1131 = vpop.f32.mrf.mxu0
      %v1132 = vadd.f32 %v565, %v1131
      %v1133 = vpop.f32.mrf.mxu0
      %v1134 = vadd.f32 %v570, %v1133
      %1135 = vmatmul.bf16.gmra.mxu0 %v1011
      %v1136 = vpop.f32.mrf.mxu0
      %v1137 = vadd.f32 %v575, %v1136
      %v1138 = vpop.f32.mrf.mxu0
      %v1139 = vadd.f32 %v580, %v1138
      %1140 = vmatmul.bf16.gmra.mxu0 %v1012
      %v1141 = vpop.f32.mrf.mxu0
      %v1142 = vadd.f32 %v585, %v1141
      %v1143 = vpop.f32.mrf.mxu0
      %v1144 = vadd.f32 %v590, %v1143
      %1145 = vmatmul.bf16.gmra.mxu0 %v1013
      %v1146 = vpop.f32.mrf.mxu0
      %v1147 = vadd.f32 %v595, %v1146
      %v1148 = vpop.f32.mrf.mxu0
      %v1149 = vadd.f32 %v600, %v1148
      %1150 = vmatmul.bf16.gmra.mxu0 %v1014
      %v1151 = vpop.f32.mrf.mxu0
      %v1152 = vadd.f32 %v605, %v1151
      %v1153 = vpop.f32.mrf.mxu0
      %v1154 = vadd.f32 %v610, %v1153
      %1155 = vmatmul.bf16.gmra.mxu0 %v1015
      %v1156 = vpop.f32.mrf.mxu0
      %v1157 = vadd.f32 %v615, %v1156
      %v1158 = vpop.f32.mrf.mxu0
      %v1159 = vadd.f32 %v620, %v1158
      %1160 = vmatmul.bf16.gmra.mxu0 %v1016
      %v1161 = vpop.f32.mrf.mxu0
      %v1162 = vadd.f32 %v625, %v1161
      %v1163 = vpop.f32.mrf.mxu0
      %v1164 = vadd.f32 %v630, %v1163
      %1165 = vmatmul.bf16.gmra.mxu0 %v1017
      %v1166 = vpop.f32.mrf.mxu0
      %v1167 = vadd.f32 %v635, %v1166
      %v1168 = vpop.f32.mrf.mxu0
      %v1169 = vadd.f32 %v640, %v1168
      %1170 = vmatmul.bf16.gmra.mxu0 %v1018
      %v1171 = vpop.f32.mrf.mxu0
      %v1172 = vadd.f32 %v645, %v1171
      %v1173 = vpop.f32.mrf.mxu0
      %v1174 = vadd.f32 %v650, %v1173
      %1175 = vmatmul.bf16.gmra.mxu0 %v1019
      %v1176 = vpop.f32.mrf.mxu0
      %v1177 = vadd.f32 %v655, %v1176
      %v1178 = vpop.f32.mrf.mxu0
      %v1179 = vadd.f32 %v660, %v1178
      %1180 = vmatmul.bf16.gmra.mxu0 %v1020
      %v1181 = vpop.f32.mrf.mxu0
      %v1182 = vadd.f32 %v665, %v1181
      %v1183 = vpop.f32.mrf.mxu0
      %v1184 = vadd.f32 %v670, %v1183
      %1185 = vmatmul.bf16.gmra.mxu0 %v1021
      %v1186 = vpop.f32.mrf.mxu0
      %v1187 = vadd.f32 %v675, %v1186
      %v1188 = vpop.f32.mrf.mxu0
      %v1189 = vadd.f32 %v680, %v1188
      %1190 = vmatmul.bf16.gmra.mxu0 %v1022
      %v1191 = vpop.f32.mrf.mxu0
      %v1192 = vadd.f32 %v685, %v1191
      %v1193 = vpop.f32.mrf.mxu0
      %v1194 = vadd.f32 %v690, %v1193
      %1195 = vmatmul.bf16.gmra.mxu0 %v1023
      %v1196 = vpop.f32.mrf.mxu0
      %v1197 = vadd.f32 %v695, %v1196
      %v1198 = vpop.f32.mrf.mxu0
      %v1199 = vadd.f32 %v700, %v1198
      %1200 = vmatmul.bf16.gmra.mxu0 %v1024
      %v1201 = vpop.f32.mrf.mxu0
      %v1202 = vadd.f32 %v705, %v1201
      %v1203 = vpop.f32.mrf.mxu0
      %v1204 = vadd.f32 %v710, %v1203
      %1205 = vmatmul.bf16.gmra.mxu0 %v1025
      %v1206 = vpop.f32.mrf.mxu0
      %v1207 = vadd.f32 %v715, %v1206
      %v1208 = vpop.f32.mrf.mxu0
      %v1209 = vadd.f32 %v720, %v1208
      %1210 = vmatmul.bf16.gmra.mxu0 %v1026
      %v1211 = vpop.f32.mrf.mxu0
      %v1212 = vadd.f32 %v725, %v1211
      %v1213 = vpop.f32.mrf.mxu0
      %v1214 = vadd.f32 %v730, %v1213
      %1215 = vmatmul.bf16.gmra.mxu0 %v1027
      %v1216 = vpop.f32.mrf.mxu0
      %v1217 = vadd.f32 %v735, %v1216
      %v1218 = vpop.f32.mrf.mxu0
      %v1219 = vadd.f32 %v740, %v1218
      %1220 = vmatmul.bf16.gmra.mxu0 %v1028
      %v1221 = vpop.f32.mrf.mxu0
      %v1222 = vadd.f32 %v745, %v1221
      %v1223 = vpop.f32.mrf.mxu0
      %v1224 = vadd.f32 %v750, %v1223
      %1225 = vmatmul.bf16.gmra.mxu0 %v1029
      %v1226 = vpop.f32.mrf.mxu0
      %v1227 = vadd.f32 %v755, %v1226
      %v1228 = vpop.f32.mrf.mxu0
      %v1229 = vadd.f32 %v760, %v1228
      %1230 = vmatmul.bf16.gmra.mxu0 %v1030
      %v1231 = vpop.f32.mrf.mxu0
      %v1232 = vadd.f32 %v765, %v1231
      %v1233 = vpop.f32.mrf.mxu0
      %v1234 = vadd.f32 %v770, %v1233
      %1235 = vmatmul.bf16.gmra.mxu0 %v1031
      %v1236 = vpop.f32.mrf.mxu0
      %v1237 = vadd.f32 %v775, %v1236
      %v1238 = vpop.f32.mrf.mxu0
      %v1239 = vadd.f32 %v780, %v1238
      %1240 = vmatmul.bf16.gmra.mxu0 %v1032
      %v1241 = vpop.f32.mrf.mxu0
      %v1242 = vadd.f32 %v785, %v1241
      %v1243 = vpop.f32.mrf.mxu0
      %v1244 = vadd.f32 %v790, %v1243
      %1245 = vmatmul.bf16.gmra.mxu0 %v1033
      %v1246 = vpop.f32.mrf.mxu0
      %v1247 = vadd.f32 %v795, %v1246
      %v1248 = vpop.f32.mrf.mxu0
      %v1249 = vadd.f32 %v800, %v1248
      %1250 = vmatmul.bf16.gmra.mxu0 %v1034
      %v1251 = vpop.f32.mrf.mxu0
      %v1252 = vadd.f32 %v805, %v1251
      %v1253 = vpop.f32.mrf.mxu0
      %v1254 = vadd.f32 %v810, %v1253
      %1255 = vmatmul.bf16.gmra.mxu0 %v1035
      %v1256 = vpop.f32.mrf.mxu0
      %v1257 = vadd.f32 %v815, %v1256
      %v1258 = vpop.f32.mrf.mxu0
      %v1259 = vadd.f32 %v820, %v1258
      %1260 = vmatmul.bf16.gmra.mxu0 %v1036
      %v1261 = vpop.f32.mrf.mxu0
      %v1262 = vadd.f32 %v825, %v1261
      %v1263 = vpop.f32.mrf.mxu0
      %v1264 = vadd.f32 %v830, %v1263
      %1265 = vmatmul.bf16.gmra.mxu0 %v1037
      %v1266 = vpop.f32.mrf.mxu0
      %v1267 = vadd.f32 %v835, %v1266
      %v1268 = vpop.f32.mrf.mxu0
      %v1269 = vadd.f32 %v840, %v1268
      %1270 = vmatmul.bf16.gmra.mxu0 %v1038
      %v1271 = vpop.f32.mrf.mxu0
      %v1272 = vadd.f32 %v845, %v1271
      %v1273 = vpop.f32.mrf.mxu0
      %v1274 = vadd.f32 %v850, %v1273
      %1275 = vmatmul.bf16.gmra.mxu0 %v1039
      %v1276 = vpop.f32.mrf.mxu0
      %v1277 = vadd.f32 %v855, %v1276
      %v1278 = vpop.f32.mrf.mxu0
      %v1279 = vadd.f32 %v860, %v1278
      %1280 = vmatmul.bf16.gmra.mxu0 %v1040
      %v1281 = vpop.f32.mrf.mxu0
      %v1282 = vadd.f32 %v865, %v1281
      %v1283 = vpop.f32.mrf.mxu0
      %v1284 = vadd.f32 %v870, %v1283
      %1285 = vmatmul.bf16.gmra.mxu0 %v1041
      %v1286 = vpop.f32.mrf.mxu0
      %v1287 = vadd.f32 %v875, %v1286
      %v1288 = vpop.f32.mrf.mxu0
      %v1289 = vadd.f32 %v880, %v1288
      %1290 = vdwg.mxu0
      %v1291 = vmax.f32 %v1132, 0.0
      %v1292 = vmax.f32 %v1134, 0.0
      %v1293 = vmax.f32 %v1137, 0.0
      %v1294 = vmax.f32 %v1139, 0.0
      %v1295 = vmax.f32 %v1142, 0.0
      %v1296 = vmax.f32 %v1144, 0.0
      %v1297 = vmax.f32 %v1147, 0.0
      %v1298 = vmax.f32 %v1149, 0.0
      %v1299 = vmax.f32 %v1152, 0.0
      %v1300 = vmax.f32 %v1154, 0.0
      %v1301 = vmax.f32 %v1157, 0.0
      %v1302 = vmax.f32 %v1159, 0.0
      %v1303 = vmax.f32 %v1162, 0.0
      %v1304 = vmax.f32 %v1164, 0.0
      %v1305 = vmax.f32 %v1167, 0.0
      %v1306 = vmax.f32 %v1169, 0.0
      %v1307 = vmax.f32 %v1172, 0.0
      %v1308 = vmax.f32 %v1174, 0.0
      %v1309 = vmax.f32 %v1177, 0.0
      %v1310 = vmax.f32 %v1179, 0.0
      %v1311 = vmax.f32 %v1182, 0.0
      %v1312 = vmax.f32 %v1184, 0.0
      %v1313 = vmax.f32 %v1187, 0.0
      %v1314 = vmax.f32 %v1189, 0.0
      %v1315 = vmax.f32 %v1192, 0.0
      %v1316 = vmax.f32 %v1194, 0.0
      %v1317 = vmax.f32 %v1197, 0.0
      %v1318 = vmax.f32 %v1199, 0.0
      %v1319 = vmax.f32 %v1202, 0.0
      %v1320 = vmax.f32 %v1204, 0.0
      %v1321 = vmax.f32 %v1207, 0.0
      %v1322 = vmax.f32 %v1209, 0.0
      %v1323 = vmax.f32 %v1212, 0.0
      %v1324 = vmax.f32 %v1214, 0.0
      %v1325 = vmax.f32 %v1217, 0.0
      %v1326 = vmax.f32 %v1219, 0.0
      %v1327 = vmax.f32 %v1222, 0.0
      %v1328 = vmax.f32 %v1224, 0.0
      %v1329 = vmax.f32 %v1227, 0.0
      %v1330 = vmax.f32 %v1229, 0.0
      %v1331 = vmax.f32 %v1232, 0.0
      %v1332 = vmax.f32 %v1234, 0.0
      %v1333 = vmax.f32 %v1237, 0.0
      %v1334 = vmax.f32 %v1239, 0.0
      %v1335 = vmax.f32 %v1242, 0.0
      %v1336 = vmax.f32 %v1244, 0.0
      %v1337 = vmax.f32 %v1247, 0.0
      %v1338 = vmax.f32 %v1249, 0.0
      %v1339 = vmax.f32 %v1252, 0.0
      %v1340 = vmax.f32 %v1254, 0.0
      %v1341 = vmax.f32 %v1257, 0.0
      %v1342 = vmax.f32 %v1259, 0.0
      %v1343 = vmax.f32 %v1262, 0.0
      %v1344 = vmax.f32 %v1264, 0.0
      %v1345 = vmax.f32 %v1267, 0.0
      %v1346 = vmax.f32 %v1269, 0.0
      %v1347 = vmax.f32 %v1272, 0.0
      %v1348 = vmax.f32 %v1274, 0.0
      %v1349 = vmax.f32 %v1277, 0.0
      %v1350 = vmax.f32 %v1279, 0.0
      %v1351 = vmax.f32 %v1282, 0.0
      %v1352 = vmax.f32 %v1284, 0.0
      %v1353 = vmax.f32 %v1287, 0.0
      %v1354 = vmax.f32 %v1289, 0.0
      %v1355 = vld [vmem:[%s3] sm:$0xff]
      %v1356 = vld [vmem:[%s3 + $0x8] sm:$0xff]
      %v1357 = vld [vmem:[%s3 + $0x10] sm:$0xff]
      %v1358 = vld [vmem:[%s3 + $0x18] sm:$0xff]
      %v1359 = vld [vmem:[%s3 + $0x20] sm:$0xff]
      %v1360 = vld [vmem:[%s3 + $0x28] sm:$0xff]
      %v1361 = vld [vmem:[%s3 + $0x30] sm:$0xff]
      %v1362 = vld [vmem:[%s3 + $0x38] sm:$0xff]
      %v1363 = vld [vmem:[%s3 + $0x40] sm:$0xff]
      %v1364 = vld [vmem:[%s3 + $0x48] sm:$0xff]
      %v1365 = vld [vmem:[%s3 + $0x50] sm:$0xff]
      %v1366 = vld [vmem:[%s3 + $0x58] sm:$0xff]
      %v1367 = vld [vmem:[%s3 + $0x60] sm:$0xff]
      %v1368 = vld [vmem:[%s3 + $0x68] sm:$0xff]
      %v1369 = vld [vmem:[%s3 + $0x70] sm:$0xff]
      %v1370 = vld [vmem:[%s3 + $0x78] sm:$0xff]
      %v1371 = vld [vmem:[%s3 + $0x80] sm:$0xff]
      %v1372 = vld [vmem:[%s3 + $0x88] sm:$0xff]
      %v1373 = vld [vmem:[%s3 + $0x90] sm:$0xff]
      %v1374 = vld [vmem:[%s3 + $0x98] sm:$0xff]
      %v1375 = vld [vmem:[%s3 + $0xa0] sm:$0xff]
      %v1376 = vld [vmem:[%s3 + $0xa8] sm:$0xff]
      %v1377 = vld [vmem:[%s3 + $0xb0] sm:$0xff]
      %v1378 = vld [vmem:[%s3 + $0xb8] sm:$0xff]
      %v1379 = vld [vmem:[%s3 + $0xc0] sm:$0xff]
      %v1380 = vld [vmem:[%s3 + $0xc8] sm:$0xff]
      %v1381 = vld [vmem:[%s3 + $0xd0] sm:$0xff]
      %v1382 = vld [vmem:[%s3 + $0xd8] sm:$0xff]
      %v1383 = vld [vmem:[%s3 + $0xe0] sm:$0xff]
      %v1384 = vld [vmem:[%s3 + $0xe8] sm:$0xff]
      %v1385 = vld [vmem:[%s3 + $0xf0] sm:$0xff]
      %v1386 = vld [vmem:[%s3 + $0xf8] sm:$0xff]
      %v1387 = vpack.c.bf16 %v1292, %v1291
      %v1388 = vpack.c.bf16 %v1294, %v1293
      %v1389 = vpack.c.bf16 %v1296, %v1295
      %v1390 = vpack.c.bf16 %v1298, %v1297
      %v1391 = vpack.c.bf16 %v1300, %v1299
      %v1392 = vpack.c.bf16 %v1302, %v1301
      %v1393 = vpack.c.bf16 %v1304, %v1303
      %v1394 = vpack.c.bf16 %v1306, %v1305
      %v1395 = vpack.c.bf16 %v1308, %v1307
      %v1396 = vpack.c.bf16 %v1310, %v1309
      %v1397 = vpack.c.bf16 %v1312, %v1311
      %v1398 = vpack.c.bf16 %v1314, %v1313
      %v1399 = vpack.c.bf16 %v1316, %v1315
      %v1400 = vpack.c.bf16 %v1318, %v1317
      %v1401 = vpack.c.bf16 %v1320, %v1319
      %v1402 = vpack.c.bf16 %v1322, %v1321
      %v1403 = vpack.c.bf16 %v1324, %v1323
      %v1404 = vpack.c.bf16 %v1326, %v1325
      %v1405 = vpack.c.bf16 %v1328, %v1327
      %v1406 = vpack.c.bf16 %v1330, %v1329
      %v1407 = vpack.c.bf16 %v1332, %v1331
      %v1408 = vpack.c.bf16 %v1334, %v1333
      %v1409 = vpack.c.bf16 %v1336, %v1335
      %v1410 = vpack.c.bf16 %v1338, %v1337
      %v1411 = vpack.c.bf16 %v1340, %v1339
      %v1412 = vpack.c.bf16 %v1342, %v1341
      %v1413 = vpack.c.bf16 %v1344, %v1343
      %v1414 = vpack.c.bf16 %v1346, %v1345
      %v1415 = vpack.c.bf16 %v1348, %v1347
      %v1416 = vpack.c.bf16 %v1350, %v1349
      %v1417 = vpack.c.bf16 %v1352, %v1351
      %v1418 = vpack.c.bf16 %v1354, %v1353
      %v1419 = vld [vmem:[%s4] sm:$0xff]
      %v1420 = vld [vmem:[%s4 + $0x8] sm:$0xff]
      %v1421 = vld [vmem:[%s4 + $0x10] sm:$0xff]
      %v1422 = vld [vmem:[%s4 + $0x18] sm:$0xff]
      %v1423 = vld [vmem:[%s4 + $0x20] sm:$0xff]
      %v1424 = vld [vmem:[%s4 + $0x28] sm:$0xff]
      %v1425 = vld [vmem:[%s4 + $0x30] sm:$0xff]
      %v1426 = vld [vmem:[%s4 + $0x38] sm:$0xff]
      %v1427 = vld [vmem:[%s4 + $0x40] sm:$0xff]
      %v1428 = vld [vmem:[%s4 + $0x48] sm:$0xff]
      %v1429 = vld [vmem:[%s4 + $0x50] sm:$0xff]
      %v1430 = vld [vmem:[%s4 + $0x58] sm:$0xff]
      %v1431 = vld [vmem:[%s4 + $0x60] sm:$0xff]
      %v1432 = vld [vmem:[%s4 + $0x68] sm:$0xff]
      %v1433 = vld [vmem:[%s4 + $0x70] sm:$0xff]
      %v1434 = vld [vmem:[%s4 + $0x78] sm:$0xff]
      %1436 = vset.pattern.permute.xlu0 0
      %1437 = vperm.xlu0 %1436, %v1419
      %v1438 = vpop.permute.xlu0 %1437
      %1441 = vset.pattern.permute.xlu0 0
      %1442 = vperm.xlu0 %1441, %v1420
      %v1443 = vpop.permute.xlu0 %1442
      %1446 = vset.pattern.permute.xlu0 0
      %1447 = vperm.xlu0 %1446, %v1421
      %v1448 = vpop.permute.xlu0 %1447
      %1451 = vset.pattern.permute.xlu0 0
      %1452 = vperm.xlu0 %1451, %v1422
      %v1453 = vpop.permute.xlu0 %1452
      %1456 = vset.pattern.permute.xlu0 0
      %1457 = vperm.xlu0 %1456, %v1423
      %v1458 = vpop.permute.xlu0 %1457
      %1461 = vset.pattern.permute.xlu0 0
      %1462 = vperm.xlu0 %1461, %v1424
      %v1463 = vpop.permute.xlu0 %1462
      %1466 = vset.pattern.permute.xlu0 0
      %1467 = vperm.xlu0 %1466, %v1425
      %v1468 = vpop.permute.xlu0 %1467
      %1471 = vset.pattern.permute.xlu0 0
      %1472 = vperm.xlu0 %1471, %v1426
      %v1473 = vpop.permute.xlu0 %1472
      %1476 = vset.pattern.permute.xlu0 0
      %1477 = vperm.xlu0 %1476, %v1427
      %v1478 = vpop.permute.xlu0 %1477
      %1481 = vset.pattern.permute.xlu0 0
      %1482 = vperm.xlu0 %1481, %v1428
      %v1483 = vpop.permute.xlu0 %1482
      %1486 = vset.pattern.permute.xlu0 0
      %1487 = vperm.xlu0 %1486, %v1429
      %v1488 = vpop.permute.xlu0 %1487
      %1491 = vset.pattern.permute.xlu0 0
      %1492 = vperm.xlu0 %1491, %v1430
      %v1493 = vpop.permute.xlu0 %1492
      %1496 = vset.pattern.permute.xlu0 0
      %1497 = vperm.xlu0 %1496, %v1431
      %v1498 = vpop.permute.xlu0 %1497
      %1501 = vset.pattern.permute.xlu0 0
      %1502 = vperm.xlu0 %1501, %v1432
      %v1503 = vpop.permute.xlu0 %1502
      %1506 = vset.pattern.permute.xlu0 0
      %1507 = vperm.xlu0 %1506, %v1433
      %v1508 = vpop.permute.xlu0 %1507
      %1511 = vset.pattern.permute.xlu0 0
      %1512 = vperm.xlu0 %1511, %v1434
      %v1513 = vpop.permute.xlu0 %1512
      %v1547 = vunpack.c.l.b16 %v1355
      %v1548 = vunpack.c.h.b16 %v1355
      %v1549 = vunpack.c.l.b16 %v1356
      %v1550 = vunpack.c.h.b16 %v1356
      %v1551 = vunpack.c.l.b16 %v1357
      %v1552 = vunpack.c.h.b16 %v1357
      %v1553 = vunpack.c.l.b16 %v1358
      %v1554 = vunpack.c.h.b16 %v1358
      %v1555 = vunpack.c.l.b16 %v1359
      %v1556 = vunpack.c.h.b16 %v1359
      %v1557 = vunpack.c.l.b16 %v1360
      %v1558 = vunpack.c.h.b16 %v1360
      %v1559 = vunpack.c.l.b16 %v1361
      %v1560 = vunpack.c.h.b16 %v1361
      %v1561 = vunpack.c.l.b16 %v1362
      %v1562 = vunpack.c.h.b16 %v1362
      %v1563 = vunpack.c.l.b16 %v1363
      %v1564 = vunpack.c.h.b16 %v1363
      %v1565 = vunpack.c.l.b16 %v1364
      %v1566 = vunpack.c.h.b16 %v1364
      %v1567 = vunpack.c.l.b16 %v1365
      %v1568 = vunpack.c.h.b16 %v1365
      %v1569 = vunpack.c.l.b16 %v1366
      %v1570 = vunpack.c.h.b16 %v1366
      %v1571 = vunpack.c.l.b16 %v1367
      %v1572 = vunpack.c.h.b16 %v1367
      %v1573 = vunpack.c.l.b16 %v1368
      %v1574 = vunpack.c.h.b16 %v1368
      %v1575 = vunpack.c.l.b16 %v1369
      %v1576 = vunpack.c.h.b16 %v1369
      %v1577 = vunpack.c.l.b16 %v1370
      %v1578 = vunpack.c.h.b16 %v1370
      %v1579 = vunpack.c.l.b16 %v1371
      %v1580 = vunpack.c.h.b16 %v1371
      %v1581 = vunpack.c.l.b16 %v1372
      %v1582 = vunpack.c.h.b16 %v1372
      %v1583 = vunpack.c.l.b16 %v1373
      %v1584 = vunpack.c.h.b16 %v1373
      %v1585 = vunpack.c.l.b16 %v1374
      %v1586 = vunpack.c.h.b16 %v1374
      %v1587 = vunpack.c.l.b16 %v1375
      %v1588 = vunpack.c.h.b16 %v1375
      %v1589 = vunpack.c.l.b16 %v1376
      %v1590 = vunpack.c.h.b16 %v1376
      %v1591 = vunpack.c.l.b16 %v1377
      %v1592 = vunpack.c.h.b16 %v1377
      %v1593 = vunpack.c.l.b16 %v1378
      %v1594 = vunpack.c.h.b16 %v1378
      %v1595 = vunpack.c.l.b16 %v1379
      %v1596 = vunpack.c.h.b16 %v1379
      %v1597 = vunpack.c.l.b16 %v1380
      %v1598 = vunpack.c.h.b16 %v1380
      %v1599 = vunpack.c.l.b16 %v1381
      %v1600 = vunpack.c.h.b16 %v1381
      %v1601 = vunpack.c.l.b16 %v1382
      %v1602 = vunpack.c.h.b16 %v1382
      %v1603 = vunpack.c.l.b16 %v1383
      %v1604 = vunpack.c.h.b16 %v1383
      %v1605 = vunpack.c.l.b16 %v1384
      %v1606 = vunpack.c.h.b16 %v1384
      %v1607 = vunpack.c.l.b16 %v1385
      %v1608 = vunpack.c.h.b16 %v1385
      %v1609 = vunpack.c.l.b16 %v1386
      %v1610 = vunpack.c.h.b16 %v1386
      %v1611 = vpack.c.b16 %v1551, %v1547
      %v1612 = vpack.c.b16 %v1552, %v1548
      %v1613 = vpack.c.b16 %v1553, %v1549
      %v1614 = vpack.c.b16 %v1554, %v1550
      %v1615 = vpack.c.b16 %v1559, %v1555
      %v1616 = vpack.c.b16 %v1560, %v1556
      %v1617 = vpack.c.b16 %v1561, %v1557
      %v1618 = vpack.c.b16 %v1562, %v1558
      %v1619 = vpack.c.b16 %v1567, %v1563
      %v1620 = vpack.c.b16 %v1568, %v1564
      %v1621 = vpack.c.b16 %v1569, %v1565
      %v1622 = vpack.c.b16 %v1570, %v1566
      %v1623 = vpack.c.b16 %v1575, %v1571
      %v1624 = vpack.c.b16 %v1576, %v1572
      %v1625 = vpack.c.b16 %v1577, %v1573
      %v1626 = vpack.c.b16 %v1578, %v1574
      %v1627 = vpack.c.b16 %v1583, %v1579
      %v1628 = vpack.c.b16 %v1584, %v1580
      %v1629 = vpack.c.b16 %v1585, %v1581
      %v1630 = vpack.c.b16 %v1586, %v1582
      %v1631 = vpack.c.b16 %v1591, %v1587
      %v1632 = vpack.c.b16 %v1592, %v1588
      %v1633 = vpack.c.b16 %v1593, %v1589
      %v1634 = vpack.c.b16 %v1594, %v1590
      %v1635 = vpack.c.b16 %v1599, %v1595
      %v1636 = vpack.c.b16 %v1600, %v1596
      %v1637 = vpack.c.b16 %v1601, %v1597
      %v1638 = vpack.c.b16 %v1602, %v1598
      %v1639 = vpack.c.b16 %v1607, %v1603
      %v1640 = vpack.c.b16 %v1608, %v1604
      %v1641 = vpack.c.b16 %v1609, %v1605
      %v1642 = vpack.c.b16 %v1610, %v1606
      %1675 = vmatpush.bf16.msra.mxu0 %v1394
      %1676 = vmatpush.bf16.msra.mxu0 %v1393
      %1677 = vmatpush.bf16.msra.mxu0 %v1392
      %1678 = vmatpush.bf16.msra.mxu0 %v1391
      %1679 = vmatpush.bf16.msra.mxu0 %v1390
      %1680 = vmatpush.bf16.msra.mxu0 %v1389
      %1681 = vmatpush.bf16.msra.mxu0 %v1388
      %1682 = vmatpush.bf16.msra.mxu0 %v1387
      %1683 = vmatmul.bf16.gmra.mxu0 %v1611
      %v1684 = vpop.f32.mrf.mxu0
      %v1685 = vadd.f32 %v1438, %v1684
      %v1686 = vpop.f32.mrf.mxu0
      %v1687 = vadd.f32 %v1443, %v1686
      %1688 = vmatmul.bf16.gmra.mxu0 %v1615
      %v1689 = vpop.f32.mrf.mxu0
      %v1690 = vadd.f32 %v1448, %v1689
      %v1691 = vpop.f32.mrf.mxu0
      %v1692 = vadd.f32 %v1453, %v1691
      %1693 = vmatmul.bf16.gmra.mxu0 %v1619
      %v1694 = vpop.f32.mrf.mxu0
      %v1695 = vadd.f32 %v1458, %v1694
      %v1696 = vpop.f32.mrf.mxu0
      %v1697 = vadd.f32 %v1463, %v1696
      %1698 = vmatmul.bf16.gmra.mxu0 %v1623
      %v1699 = vpop.f32.mrf.mxu0
      %v1700 = vadd.f32 %v1468, %v1699
      %v1701 = vpop.f32.mrf.mxu0
      %v1702 = vadd.f32 %v1473, %v1701
      %1703 = vmatmul.bf16.gmra.mxu0 %v1627
      %v1704 = vpop.f32.mrf.mxu0
      %v1705 = vadd.f32 %v1478, %v1704
      %v1706 = vpop.f32.mrf.mxu0
      %v1707 = vadd.f32 %v1483, %v1706
      %1708 = vmatmul.bf16.gmra.mxu0 %v1631
      %v1709 = vpop.f32.mrf.mxu0
      %v1710 = vadd.f32 %v1488, %v1709
      %v1711 = vpop.f32.mrf.mxu0
      %v1712 = vadd.f32 %v1493, %v1711
      %1713 = vmatmul.bf16.gmra.mxu0 %v1635
      %v1714 = vpop.f32.mrf.mxu0
      %v1715 = vadd.f32 %v1498, %v1714
      %v1716 = vpop.f32.mrf.mxu0
      %v1717 = vadd.f32 %v1503, %v1716
      %1718 = vmatmul.bf16.gmra.mxu0 %v1639
      %v1719 = vpop.f32.mrf.mxu0
      %v1720 = vadd.f32 %v1508, %v1719
      %v1721 = vpop.f32.mrf.mxu0
      %v1722 = vadd.f32 %v1513, %v1721
      %1723 = vdwg.mxu0
      %1724 = vmatpush.bf16.msra.mxu0 %v1402
      %1725 = vmatpush.bf16.msra.mxu0 %v1401
      %1726 = vmatpush.bf16.msra.mxu0 %v1400
      %1727 = vmatpush.bf16.msra.mxu0 %v1399
      %1728 = vmatpush.bf16.msra.mxu0 %v1398
      %1729 = vmatpush.bf16.msra.mxu0 %v1397
      %1730 = vmatpush.bf16.msra.mxu0 %v1396
      %1731 = vmatpush.bf16.msra.mxu0 %v1395
      %1732 = vmatmul.bf16.gmra.mxu0 %v1612
      %v1733 = vpop.f32.mrf.mxu0
      %v1734 = vadd.f32 %v1685, %v1733
      %v1735 = vpop.f32.mrf.mxu0
      %v1736 = vadd.f32 %v1687, %v1735
      %1737 = vmatmul.bf16.gmra.mxu0 %v1616
      %v1738 = vpop.f32.mrf.mxu0
      %v1739 = vadd.f32 %v1690, %v1738
      %v1740 = vpop.f32.mrf.mxu0
      %v1741 = vadd.f32 %v1692, %v1740
      %1742 = vmatmul.bf16.gmra.mxu0 %v1620
      %v1743 = vpop.f32.mrf.mxu0
      %v1744 = vadd.f32 %v1695, %v1743
      %v1745 = vpop.f32.mrf.mxu0
      %v1746 = vadd.f32 %v1697, %v1745
      %1747 = vmatmul.bf16.gmra.mxu0 %v1624
      %v1748 = vpop.f32.mrf.mxu0
      %v1749 = vadd.f32 %v1700, %v1748
      %v1750 = vpop.f32.mrf.mxu0
      %v1751 = vadd.f32 %v1702, %v1750
      %1752 = vmatmul.bf16.gmra.mxu0 %v1628
      %v1753 = vpop.f32.mrf.mxu0
      %v1754 = vadd.f32 %v1705, %v1753
      %v1755 = vpop.f32.mrf.mxu0
      %v1756 = vadd.f32 %v1707, %v1755
      %1757 = vmatmul.bf16.gmra.mxu0 %v1632
      %v1758 = vpop.f32.mrf.mxu0
      %v1759 = vadd.f32 %v1710, %v1758
      %v1760 = vpop.f32.mrf.mxu0
      %v1761 = vadd.f32 %v1712, %v1760
      %1762 = vmatmul.bf16.gmra.mxu0 %v1636
      %v1763 = vpop.f32.mrf.mxu0
      %v1764 = vadd.f32 %v1715, %v1763
      %v1765 = vpop.f32.mrf.mxu0
      %v1766 = vadd.f32 %v1717, %v1765
      %1767 = vmatmul.bf16.gmra.mxu0 %v1640
      %v1768 = vpop.f32.mrf.mxu0
      %v1769 = vadd.f32 %v1720, %v1768
      %v1770 = vpop.f32.mrf.mxu0
      %v1771 = vadd.f32 %v1722, %v1770
      %1772 = vdwg.mxu0
      %1773 = vmatpush.bf16.msra.mxu0 %v1410
      %1774 = vmatpush.bf16.msra.mxu0 %v1409
      %1775 = vmatpush.bf16.msra.mxu0 %v1408
      %1776 = vmatpush.bf16.msra.mxu0 %v1407
      %1777 = vmatpush.bf16.msra.mxu0 %v1406
      %1778 = vmatpush.bf16.msra.mxu0 %v1405
      %1779 = vmatpush.bf16.msra.mxu0 %v1404
      %1780 = vmatpush.bf16.msra.mxu0 %v1403
      %1781 = vmatmul.bf16.gmra.mxu0 %v1613
      %v1782 = vpop.f32.mrf.mxu0
      %v1783 = vadd.f32 %v1734, %v1782
      %v1784 = vpop.f32.mrf.mxu0
      %v1785 = vadd.f32 %v1736, %v1784
      %1786 = vmatmul.bf16.gmra.mxu0 %v1617
      %v1787 = vpop.f32.mrf.mxu0
      %v1788 = vadd.f32 %v1739, %v1787
      %v1789 = vpop.f32.mrf.mxu0
      %v1790 = vadd.f32 %v1741, %v1789
      %1791 = vmatmul.bf16.gmra.mxu0 %v1621
      %v1792 = vpop.f32.mrf.mxu0
      %v1793 = vadd.f32 %v1744, %v1792
      %v1794 = vpop.f32.mrf.mxu0
      %v1795 = vadd.f32 %v1746, %v1794
      %1796 = vmatmul.bf16.gmra.mxu0 %v1625
      %v1797 = vpop.f32.mrf.mxu0
      %v1798 = vadd.f32 %v1749, %v1797
      %v1799 = vpop.f32.mrf.mxu0
      %v1800 = vadd.f32 %v1751, %v1799
      %1801 = vmatmul.bf16.gmra.mxu0 %v1629
      %v1802 = vpop.f32.mrf.mxu0
      %v1803 = vadd.f32 %v1754, %v1802
      %v1804 = vpop.f32.mrf.mxu0
      %v1805 = vadd.f32 %v1756, %v1804
      %1806 = vmatmul.bf16.gmra.mxu0 %v1633
      %v1807 = vpop.f32.mrf.mxu0
      %v1808 = vadd.f32 %v1759, %v1807
      %v1809 = vpop.f32.mrf.mxu0
      %v1810 = vadd.f32 %v1761, %v1809
      %1811 = vmatmul.bf16.gmra.mxu0 %v1637
      %v1812 = vpop.f32.mrf.mxu0
      %v1813 = vadd.f32 %v1764, %v1812
      %v1814 = vpop.f32.mrf.mxu0
      %v1815 = vadd.f32 %v1766, %v1814
      %1816 = vmatmul.bf16.gmra.mxu0 %v1641
      %v1817 = vpop.f32.mrf.mxu0
      %v1818 = vadd.f32 %v1769, %v1817
      %v1819 = vpop.f32.mrf.mxu0
      %v1820 = vadd.f32 %v1771, %v1819
      %1821 = vdwg.mxu0
      %1822 = vmatpush.bf16.msra.mxu0 %v1418
      %1823 = vmatpush.bf16.msra.mxu0 %v1417
      %1824 = vmatpush.bf16.msra.mxu0 %v1416
      %1825 = vmatpush.bf16.msra.mxu0 %v1415
      %1826 = vmatpush.bf16.msra.mxu0 %v1414
      %1827 = vmatpush.bf16.msra.mxu0 %v1413
      %1828 = vmatpush.bf16.msra.mxu0 %v1412
      %1829 = vmatpush.bf16.msra.mxu0 %v1411
      %1830 = vmatmul.bf16.gmra.mxu0 %v1614
      %v1831 = vpop.f32.mrf.mxu0
      %v1832 = vadd.f32 %v1783, %v1831
      %v1833 = vpop.f32.mrf.mxu0
      %v1834 = vadd.f32 %v1785, %v1833
      %1835 = vmatmul.bf16.gmra.mxu0 %v1618
      %v1836 = vpop.f32.mrf.mxu0
      %v1837 = vadd.f32 %v1788, %v1836
      %v1838 = vpop.f32.mrf.mxu0
      %v1839 = vadd.f32 %v1790, %v1838
      %1840 = vmatmul.bf16.gmra.mxu0 %v1622
      %v1841 = vpop.f32.mrf.mxu0
      %v1842 = vadd.f32 %v1793, %v1841
      %v1843 = vpop.f32.mrf.mxu0
      %v1844 = vadd.f32 %v1795, %v1843
      %1845 = vmatmul.bf16.gmra.mxu0 %v1626
      %v1846 = vpop.f32.mrf.mxu0
      %v1847 = vadd.f32 %v1798, %v1846
      %v1848 = vpop.f32.mrf.mxu0
      %v1849 = vadd.f32 %v1800, %v1848
      %1850 = vmatmul.bf16.gmra.mxu0 %v1630
      %v1851 = vpop.f32.mrf.mxu0
      %v1852 = vadd.f32 %v1803, %v1851
      %v1853 = vpop.f32.mrf.mxu0
      %v1854 = vadd.f32 %v1805, %v1853
      %1855 = vmatmul.bf16.gmra.mxu0 %v1634
      %v1856 = vpop.f32.mrf.mxu0
      %v1857 = vadd.f32 %v1808, %v1856
      %v1858 = vpop.f32.mrf.mxu0
      %v1859 = vadd.f32 %v1810, %v1858
      %1860 = vmatmul.bf16.gmra.mxu0 %v1638
      %v1861 = vpop.f32.mrf.mxu0
      %v1862 = vadd.f32 %v1813, %v1861
      %v1863 = vpop.f32.mrf.mxu0
      %v1864 = vadd.f32 %v1815, %v1863
      %1865 = vmatmul.bf16.gmra.mxu0 %v1642
      %v1866 = vpop.f32.mrf.mxu0
      %v1867 = vadd.f32 %v1818, %v1866
      %v1868 = vpop.f32.mrf.mxu0
      %v1869 = vadd.f32 %v1820, %v1868
      %1870 = vdwg.mxu0
      %v1871 = vld [vmem:[%s5] sm:$0xf]
      %v1872 = vld [vmem:[%s5 + $0x4] sm:$0xf]
      %v1873 = vld [vmem:[%s5 + $0x8] sm:$0xf]
      %v1874 = vld [vmem:[%s5 + $0xc] sm:$0xf]
      %v1875 = vld [vmem:[%s5 + $0x10] sm:$0xf]
      %v1876 = vld [vmem:[%s5 + $0x14] sm:$0xf]
      %v1877 = vld [vmem:[%s5 + $0x18] sm:$0xf]
      %v1878 = vld [vmem:[%s5 + $0x1c] sm:$0xf]
      %v1879 = vld [vmem:[%s5 + $0x20] sm:$0xf]
      %v1880 = vld [vmem:[%s5 + $0x24] sm:$0xf]
      %v1881 = vld [vmem:[%s5 + $0x28] sm:$0xf]
      %v1882 = vld [vmem:[%s5 + $0x2c] sm:$0xf]
      %v1883 = vld [vmem:[%s5 + $0x30] sm:$0xf]
      %v1884 = vld [vmem:[%s5 + $0x34] sm:$0xf]
      %v1885 = vld [vmem:[%s5 + $0x38] sm:$0xf]
      %v1886 = vld [vmem:[%s5 + $0x3c] sm:$0xf]
      %v1887 = vld [vmem:[%s6] sm:$0xff]
      %v1888 = vld [vmem:[%s6 + $0x8] sm:$0xff]
      %v1889 = vld [vmem:[%s6 + $0x10] sm:$0xff]
      %v1890 = vld [vmem:[%s6 + $0x18] sm:$0xff]
      %v1891 = vld [vmem:[%s6 + $0x20] sm:$0xff]
      %v1892 = vld [vmem:[%s6 + $0x28] sm:$0xff]
      %v1893 = vld [vmem:[%s6 + $0x30] sm:$0xff]
      %v1894 = vld [vmem:[%s6 + $0x38] sm:$0xff]
      %v1895 = vld [vmem:[%s6 + $0x40] sm:$0xff]
      %v1896 = vld [vmem:[%s6 + $0x48] sm:$0xff]
      %v1897 = vld [vmem:[%s6 + $0x50] sm:$0xff]
      %v1898 = vld [vmem:[%s6 + $0x58] sm:$0xff]
      %v1899 = vld [vmem:[%s6 + $0x60] sm:$0xff]
      %v1900 = vld [vmem:[%s6 + $0x68] sm:$0xff]
      %v1901 = vld [vmem:[%s6 + $0x70] sm:$0xff]
      %v1902 = vld [vmem:[%s6 + $0x78] sm:$0xff]
      %1904 = vset.pattern.permute.xlu0 0
      %1905 = vperm.xlu0 %1904, %v1887
      %v1906 = vpop.permute.xlu0 %1905
      %1909 = vset.pattern.permute.xlu0 0
      %1910 = vperm.xlu0 %1909, %v1888
      %v1911 = vpop.permute.xlu0 %1910
      %1914 = vset.pattern.permute.xlu0 0
      %1915 = vperm.xlu0 %1914, %v1889
      %v1916 = vpop.permute.xlu0 %1915
      %1919 = vset.pattern.permute.xlu0 0
      %1920 = vperm.xlu0 %1919, %v1890
      %v1921 = vpop.permute.xlu0 %1920
      %1924 = vset.pattern.permute.xlu0 0
      %1925 = vperm.xlu0 %1924, %v1891
      %v1926 = vpop.permute.xlu0 %1925
      %1929 = vset.pattern.permute.xlu0 0
      %1930 = vperm.xlu0 %1929, %v1892
      %v1931 = vpop.permute.xlu0 %1930
      %1934 = vset.pattern.permute.xlu0 0
      %1935 = vperm.xlu0 %1934, %v1893
      %v1936 = vpop.permute.xlu0 %1935
      %1939 = vset.pattern.permute.xlu0 0
      %1940 = vperm.xlu0 %1939, %v1894
      %v1941 = vpop.permute.xlu0 %1940
      %1944 = vset.pattern.permute.xlu0 0
      %1945 = vperm.xlu0 %1944, %v1895
      %v1946 = vpop.permute.xlu0 %1945
      %1949 = vset.pattern.permute.xlu0 0
      %1950 = vperm.xlu0 %1949, %v1896
      %v1951 = vpop.permute.xlu0 %1950
      %1954 = vset.pattern.permute.xlu0 0
      %1955 = vperm.xlu0 %1954, %v1897
      %v1956 = vpop.permute.xlu0 %1955
      %1959 = vset.pattern.permute.xlu0 0
      %1960 = vperm.xlu0 %1959, %v1898
      %v1961 = vpop.permute.xlu0 %1960
      %1964 = vset.pattern.permute.xlu0 0
      %1965 = vperm.xlu0 %1964, %v1899
      %v1966 = vpop.permute.xlu0 %1965
      %1969 = vset.pattern.permute.xlu0 0
      %1970 = vperm.xlu0 %1969, %v1900
      %v1971 = vpop.permute.xlu0 %1970
      %1974 = vset.pattern.permute.xlu0 0
      %1975 = vperm.xlu0 %1974, %v1901
      %v1976 = vpop.permute.xlu0 %1975
      %1979 = vset.pattern.permute.xlu0 0
      %1980 = vperm.xlu0 %1979, %v1902
      %v1981 = vpop.permute.xlu0 %1980
      %v1999 = vunpack.c.l.b16 %v1871
      %v2000 = vunpack.c.l.b16 %v1872
      %v2001 = vunpack.c.l.b16 %v1873
      %v2002 = vunpack.c.l.b16 %v1874
      %v2003 = vunpack.c.l.b16 %v1875
      %v2004 = vunpack.c.l.b16 %v1876
      %v2005 = vunpack.c.l.b16 %v1877
      %v2006 = vunpack.c.l.b16 %v1878
      %v2007 = vunpack.c.l.b16 %v1879
      %v2008 = vunpack.c.l.b16 %v1880
      %v2009 = vunpack.c.l.b16 %v1881
      %v2010 = vunpack.c.l.b16 %v1882
      %v2011 = vunpack.c.l.b16 %v1883
      %v2012 = vunpack.c.l.b16 %v1884
      %v2013 = vunpack.c.l.b16 %v1885
      %v2014 = vunpack.c.l.b16 %v1886
      %v2015 = vpack.c.b16 %v2000, %v1999
      %v2016 = vpack.c.b16 %v2002, %v2001
      %v2017 = vpack.c.b16 %v2004, %v2003
      %v2018 = vpack.c.b16 %v2006, %v2005
      %v2019 = vpack.c.b16 %v2008, %v2007
      %v2020 = vpack.c.b16 %v2010, %v2009
      %v2021 = vpack.c.b16 %v2012, %v2011
      %v2022 = vpack.c.b16 %v2014, %v2013
      %2031 = vmatpush.bf16.msra.mxu0 %v1113
      %2032 = vmatpush.bf16.msra.mxu0 %v1112
      %2033 = vmatpush.bf16.msra.mxu0 %v1111
      %2034 = vmatpush.bf16.msra.mxu0 %v1110
      %2035 = vmatpush.bf16.msra.mxu0 %v1109
      %2036 = vmatpush.bf16.msra.mxu0 %v1108
      %2037 = vmatpush.bf16.msra.mxu0 %v1107
      %2038 = vmatpush.bf16.msra.mxu0 %v1106
      %2039 = vmatmul.bf16.gmra.mxu0 %v2015
      %v2040 = vpop.f32.mrf.mxu0
      %v2041 = vadd.f32 %v1906, %v2040
      %v2042 = vpop.f32.mrf.mxu0
      %v2043 = vadd.f32 %v1911, %v2042
      %2044 = vmatmul.bf16.gmra.mxu0 %v2016
      %v2045 = vpop.f32.mrf.mxu0
      %v2046 = vadd.f32 %v1916, %v2045
      %v2047 = vpop.f32.mrf.mxu0
      %v2048 = vadd.f32 %v1921, %v2047
      %2049 = vmatmul.bf16.gmra.mxu0 %v2017
      %v2050 = vpop.f32.mrf.mxu0
      %v2051 = vadd.f32 %v1926, %v2050
      %v2052 = vpop.f32.mrf.mxu0
      %v2053 = vadd.f32 %v1931, %v2052
      %2054 = vmatmul.bf16.gmra.mxu0 %v2018
      %v2055 = vpop.f32.mrf.mxu0
      %v2056 = vadd.f32 %v1936, %v2055
      %v2057 = vpop.f32.mrf.mxu0
      %v2058 = vadd.f32 %v1941, %v2057
      %2059 = vmatmul.bf16.gmra.mxu0 %v2019
      %v2060 = vpop.f32.mrf.mxu0
      %v2061 = vadd.f32 %v1946, %v2060
      %v2062 = vpop.f32.mrf.mxu0
      %v2063 = vadd.f32 %v1951, %v2062
      %2064 = vmatmul.bf16.gmra.mxu0 %v2020
      %v2065 = vpop.f32.mrf.mxu0
      %v2066 = vadd.f32 %v1956, %v2065
      %v2067 = vpop.f32.mrf.mxu0
      %v2068 = vadd.f32 %v1961, %v2067
      %2069 = vmatmul.bf16.gmra.mxu0 %v2021
      %v2070 = vpop.f32.mrf.mxu0
      %v2071 = vadd.f32 %v1966, %v2070
      %v2072 = vpop.f32.mrf.mxu0
      %v2073 = vadd.f32 %v1971, %v2072
      %2074 = vmatmul.bf16.gmra.mxu0 %v2022
      %v2075 = vpop.f32.mrf.mxu0
      %v2076 = vadd.f32 %v1976, %v2075
      %v2077 = vpop.f32.mrf.mxu0
      %v2078 = vadd.f32 %v1981, %v2077
      %2079 = vdwg.mxu0
      %v2080 = vadd.f32 %v2041, %v1832
      %v2081 = vadd.f32 %v2043, %v1834
      %v2082 = vadd.f32 %v2046, %v1837
      %v2083 = vadd.f32 %v2048, %v1839
      %v2084 = vadd.f32 %v2051, %v1842
      %v2085 = vadd.f32 %v2053, %v1844
      %v2086 = vadd.f32 %v2056, %v1847
      %v2087 = vadd.f32 %v2058, %v1849
      %v2088 = vadd.f32 %v2061, %v1852
      %v2089 = vadd.f32 %v2063, %v1854
      %v2090 = vadd.f32 %v2066, %v1857
      %v2091 = vadd.f32 %v2068, %v1859
      %v2092 = vadd.f32 %v2071, %v1862
      %v2093 = vadd.f32 %v2073, %v1864
      %v2094 = vadd.f32 %v2076, %v1867
      %v2095 = vadd.f32 %v2078, %v1869
      %v2096 = vld [vmem:[%s7] sm:$0xf]
      %v2097 = vld [vmem:[%s7 + $0x4] sm:$0xf]
      %v2098 = vld [vmem:[%s7 + $0x8] sm:$0xf]
      %v2099 = vld [vmem:[%s7 + $0xc] sm:$0xf]
      %v2100 = vld [vmem:[%s7 + $0x10] sm:$0xf]
      %v2101 = vld [vmem:[%s7 + $0x14] sm:$0xf]
      %v2102 = vld [vmem:[%s7 + $0x18] sm:$0xf]
      %v2103 = vld [vmem:[%s7 + $0x1c] sm:$0xf]
      %v2104 = vld [vmem:[%s7 + $0x20] sm:$0xf]
      %v2105 = vld [vmem:[%s7 + $0x24] sm:$0xf]
      %v2106 = vld [vmem:[%s7 + $0x28] sm:$0xf]
      %v2107 = vld [vmem:[%s7 + $0x2c] sm:$0xf]
      %v2108 = vld [vmem:[%s7 + $0x30] sm:$0xf]
      %v2109 = vld [vmem:[%s7 + $0x34] sm:$0xf]
      %v2110 = vld [vmem:[%s7 + $0x38] sm:$0xf]
      %v2111 = vld [vmem:[%s7 + $0x3c] sm:$0xf]
      %v2112 = vld [vmem:[%s7 + $0x40] sm:$0xf]
      %v2113 = vld [vmem:[%s7 + $0x44] sm:$0xf]
      %v2114 = vld [vmem:[%s7 + $0x48] sm:$0xf]
      %v2115 = vld [vmem:[%s7 + $0x4c] sm:$0xf]
      %v2116 = vld [vmem:[%s7 + $0x50] sm:$0xf]
      %v2117 = vld [vmem:[%s7 + $0x54] sm:$0xf]
      %v2118 = vld [vmem:[%s7 + $0x58] sm:$0xf]
      %v2119 = vld [vmem:[%s7 + $0x5c] sm:$0xf]
      %v2120 = vld [vmem:[%s7 + $0x60] sm:$0xf]
      %v2121 = vld [vmem:[%s7 + $0x64] sm:$0xf]
      %v2122 = vld [vmem:[%s7 + $0x68] sm:$0xf]
      %v2123 = vld [vmem:[%s7 + $0x6c] sm:$0xf]
      %v2124 = vld [vmem:[%s7 + $0x70] sm:$0xf]
      %v2125 = vld [vmem:[%s7 + $0x74] sm:$0xf]
      %v2126 = vld [vmem:[%s7 + $0x78] sm:$0xf]
      %v2127 = vld [vmem:[%s7 + $0x7c] sm:$0xf]
      %v2128 = vld [vmem:[%s7 + $0x80] sm:$0xf]
      %v2129 = vld [vmem:[%s7 + $0x84] sm:$0xf]
      %v2130 = vld [vmem:[%s7 + $0x88] sm:$0xf]
      %v2131 = vld [vmem:[%s7 + $0x8c] sm:$0xf]
      %v2132 = vld [vmem:[%s7 + $0x90] sm:$0xf]
      %v2133 = vld [vmem:[%s7 + $0x94] sm:$0xf]
      %v2134 = vld [vmem:[%s7 + $0x98] sm:$0xf]
      %v2135 = vld [vmem:[%s7 + $0x9c] sm:$0xf]
      %v2136 = vld [vmem:[%s7 + $0xa0] sm:$0xf]
      %v2137 = vld [vmem:[%s7 + $0xa4] sm:$0xf]
      %v2138 = vld [vmem:[%s7 + $0xa8] sm:$0xf]
      %v2139 = vld [vmem:[%s7 + $0xac] sm:$0xf]
      %v2140 = vld [vmem:[%s7 + $0xb0] sm:$0xf]
      %v2141 = vld [vmem:[%s7 + $0xb4] sm:$0xf]
      %v2142 = vld [vmem:[%s7 + $0xb8] sm:$0xf]
      %v2143 = vld [vmem:[%s7 + $0xbc] sm:$0xf]
      %v2144 = vld [vmem:[%s7 + $0xc0] sm:$0xf]
      %v2145 = vld [vmem:[%s7 + $0xc4] sm:$0xf]
      %v2146 = vld [vmem:[%s7 + $0xc8] sm:$0xf]
      %v2147 = vld [vmem:[%s7 + $0xcc] sm:$0xf]
      %v2148 = vld [vmem:[%s7 + $0xd0] sm:$0xf]
      %v2149 = vld [vmem:[%s7 + $0xd4] sm:$0xf]
      %v2150 = vld [vmem:[%s7 + $0xd8] sm:$0xf]
      %v2151 = vld [vmem:[%s7 + $0xdc] sm:$0xf]
      %v2152 = vld [vmem:[%s7 + $0xe0] sm:$0xf]
      %v2153 = vld [vmem:[%s7 + $0xe4] sm:$0xf]
      %v2154 = vld [vmem:[%s7 + $0xe8] sm:$0xf]
      %v2155 = vld [vmem:[%s7 + $0xec] sm:$0xf]
      %v2156 = vld [vmem:[%s7 + $0xf0] sm:$0xf]
      %v2157 = vld [vmem:[%s7 + $0xf4] sm:$0xf]
      %v2158 = vld [vmem:[%s7 + $0xf8] sm:$0xf]
      %v2159 = vld [vmem:[%s7 + $0xfc] sm:$0xf]
      %v2160 = vpack.c.bf16 %v2081, %v2080
      %v2161 = vpack.c.bf16 %v2083, %v2082
      %v2162 = vpack.c.bf16 %v2085, %v2084
      %v2163 = vpack.c.bf16 %v2087, %v2086
      %v2164 = vpack.c.bf16 %v2089, %v2088
      %v2165 = vpack.c.bf16 %v2091, %v2090
      %v2166 = vpack.c.bf16 %v2093, %v2092
      %v2167 = vpack.c.bf16 %v2095, %v2094
      %v2168 = vld [vmem:[%s8] sm:$0xff]
      %v2169 = vld [vmem:[%s8 + $0x8] sm:$0xff]
      %v2170 = vld [vmem:[%s8 + $0x10] sm:$0xff]
      %v2171 = vld [vmem:[%s8 + $0x18] sm:$0xff]
      %v2172 = vld [vmem:[%s8 + $0x20] sm:$0xff]
      %v2173 = vld [vmem:[%s8 + $0x28] sm:$0xff]
      %v2174 = vld [vmem:[%s8 + $0x30] sm:$0xff]
      %v2175 = vld [vmem:[%s8 + $0x38] sm:$0xff]
      %v2176 = vld [vmem:[%s8 + $0x40] sm:$0xff]
      %v2177 = vld [vmem:[%s8 + $0x48] sm:$0xff]
      %v2178 = vld [vmem:[%s8 + $0x50] sm:$0xff]
      %v2179 = vld [vmem:[%s8 + $0x58] sm:$0xff]
      %v2180 = vld [vmem:[%s8 + $0x60] sm:$0xff]
      %v2181 = vld [vmem:[%s8 + $0x68] sm:$0xff]
      %v2182 = vld [vmem:[%s8 + $0x70] sm:$0xff]
      %v2183 = vld [vmem:[%s8 + $0x78] sm:$0xff]
      %v2184 = vld [vmem:[%s8 + $0x80] sm:$0xff]
      %v2185 = vld [vmem:[%s8 + $0x88] sm:$0xff]
      %v2186 = vld [vmem:[%s8 + $0x90] sm:$0xff]
      %v2187 = vld [vmem:[%s8 + $0x98] sm:$0xff]
      %v2188 = vld [vmem:[%s8 + $0xa0] sm:$0xff]
      %v2189 = vld [vmem:[%s8 + $0xa8] sm:$0xff]
      %v2190 = vld [vmem:[%s8 + $0xb0] sm:$0xff]
      %v2191 = vld [vmem:[%s8 + $0xb8] sm:$0xff]
      %v2192 = vld [vmem:[%s8 + $0xc0] sm:$0xff]
      %v2193 = vld [vmem:[%s8 + $0xc8] sm:$0xff]
      %v2194 = vld [vmem:[%s8 + $0xd0] sm:$0xff]
      %v2195 = vld [vmem:[%s8 + $0xd8] sm:$0xff]
      %v2196 = vld [vmem:[%s8 + $0xe0] sm:$0xff]
      %v2197 = vld [vmem:[%s8 + $0xe8] sm:$0xff]
      %v2198 = vld [vmem:[%s8 + $0xf0] sm:$0xff]
      %v2199 = vld [vmem:[%s8 + $0xf8] sm:$0xff]
      %v2200 = vld [vmem:[%s8 + $0x100] sm:$0xff]
      %v2201 = vld [vmem:[%s8 + $0x108] sm:$0xff]
      %v2202 = vld [vmem:[%s8 + $0x110] sm:$0xff]
      %v2203 = vld [vmem:[%s8 + $0x118] sm:$0xff]
      %v2204 = vld [vmem:[%s8 + $0x120] sm:$0xff]
      %v2205 = vld [vmem:[%s8 + $0x128] sm:$0xff]
      %v2206 = vld [vmem:[%s8 + $0x130] sm:$0xff]
      %v2207 = vld [vmem:[%s8 + $0x138] sm:$0xff]
      %v2208 = vld [vmem:[%s8 + $0x140] sm:$0xff]
      %v2209 = vld [vmem:[%s8 + $0x148] sm:$0xff]
      %v2210 = vld [vmem:[%s8 + $0x150] sm:$0xff]
      %v2211 = vld [vmem:[%s8 + $0x158] sm:$0xff]
      %v2212 = vld [vmem:[%s8 + $0x160] sm:$0xff]
      %v2213 = vld [vmem:[%s8 + $0x168] sm:$0xff]
      %v2214 = vld [vmem:[%s8 + $0x170] sm:$0xff]
      %v2215 = vld [vmem:[%s8 + $0x178] sm:$0xff]
      %v2216 = vld [vmem:[%s8 + $0x180] sm:$0xff]
      %v2217 = vld [vmem:[%s8 + $0x188] sm:$0xff]
      %v2218 = vld [vmem:[%s8 + $0x190] sm:$0xff]
      %v2219 = vld [vmem:[%s8 + $0x198] sm:$0xff]
      %v2220 = vld [vmem:[%s8 + $0x1a0] sm:$0xff]
      %v2221 = vld [vmem:[%s8 + $0x1a8] sm:$0xff]
      %v2222 = vld [vmem:[%s8 + $0x1b0] sm:$0xff]
      %v2223 = vld [vmem:[%s8 + $0x1b8] sm:$0xff]
      %v2224 = vld [vmem:[%s8 + $0x1c0] sm:$0xff]
      %v2225 = vld [vmem:[%s8 + $0x1c8] sm:$0xff]
      %v2226 = vld [vmem:[%s8 + $0x1d0] sm:$0xff]
      %v2227 = vld [vmem:[%s8 + $0x1d8] sm:$0xff]
      %v2228 = vld [vmem:[%s8 + $0x1e0] sm:$0xff]
      %v2229 = vld [vmem:[%s8 + $0x1e8] sm:$0xff]
      %v2230 = vld [vmem:[%s8 + $0x1f0] sm:$0xff]
      %v2231 = vld [vmem:[%s8 + $0x1f8] sm:$0xff]
      %2233 = vset.pattern.permute.xlu0 0
      %2234 = vperm.xlu0 %2233, %v2168
      %v2235 = vpop.permute.xlu0 %2234
      %2238 = vset.pattern.permute.xlu0 0
      %2239 = vperm.xlu0 %2238, %v2169
      %v2240 = vpop.permute.xlu0 %2239
      %2243 = vset.pattern.permute.xlu0 0
      %2244 = vperm.xlu0 %2243, %v2170
      %v2245 = vpop.permute.xlu0 %2244
      %2248 = vset.pattern.permute.xlu0 0
      %2249 = vperm.xlu0 %2248, %v2171
      %v2250 = vpop.permute.xlu0 %2249
      %2253 = vset.pattern.permute.xlu0 0
      %2254 = vperm.xlu0 %2253, %v2172
      %v2255 = vpop.permute.xlu0 %2254
      %2258 = vset.pattern.permute.xlu0 0
      %2259 = vperm.xlu0 %2258, %v2173
      %v2260 = vpop.permute.xlu0 %2259
      %2263 = vset.pattern.permute.xlu0 0
      %2264 = vperm.xlu0 %2263, %v2174
      %v2265 = vpop.permute.xlu0 %2264
      %2268 = vset.pattern.permute.xlu0 0
      %2269 = vperm.xlu0 %2268, %v2175
      %v2270 = vpop.permute.xlu0 %2269
      %2273 = vset.pattern.permute.xlu0 0
      %2274 = vperm.xlu0 %2273, %v2176
      %v2275 = vpop.permute.xlu0 %2274
      %2278 = vset.pattern.permute.xlu0 0
      %2279 = vperm.xlu0 %2278, %v2177
      %v2280 = vpop.permute.xlu0 %2279
      %2283 = vset.pattern.permute.xlu0 0
      %2284 = vperm.xlu0 %2283, %v2178
      %v2285 = vpop.permute.xlu0 %2284
      %2288 = vset.pattern.permute.xlu0 0
      %2289 = vperm.xlu0 %2288, %v2179
      %v2290 = vpop.permute.xlu0 %2289
      %2293 = vset.pattern.permute.xlu0 0
      %2294 = vperm.xlu0 %2293, %v2180
      %v2295 = vpop.permute.xlu0 %2294
      %2298 = vset.pattern.permute.xlu0 0
      %2299 = vperm.xlu0 %2298, %v2181
      %v2300 = vpop.permute.xlu0 %2299
      %2303 = vset.pattern.permute.xlu0 0
      %2304 = vperm.xlu0 %2303, %v2182
      %v2305 = vpop.permute.xlu0 %2304
      %2308 = vset.pattern.permute.xlu0 0
      %2309 = vperm.xlu0 %2308, %v2183
      %v2310 = vpop.permute.xlu0 %2309
      %2313 = vset.pattern.permute.xlu0 0
      %2314 = vperm.xlu0 %2313, %v2184
      %v2315 = vpop.permute.xlu0 %2314
      %2318 = vset.pattern.permute.xlu0 0
      %2319 = vperm.xlu0 %2318, %v2185
      %v2320 = vpop.permute.xlu0 %2319
      %2323 = vset.pattern.permute.xlu0 0
      %2324 = vperm.xlu0 %2323, %v2186
      %v2325 = vpop.permute.xlu0 %2324
      %2328 = vset.pattern.permute.xlu0 0
      %2329 = vperm.xlu0 %2328, %v2187
      %v2330 = vpop.permute.xlu0 %2329
      %2333 = vset.pattern.permute.xlu0 0
      %2334 = vperm.xlu0 %2333, %v2188
      %v2335 = vpop.permute.xlu0 %2334
      %2338 = vset.pattern.permute.xlu0 0
      %2339 = vperm.xlu0 %2338, %v2189
      %v2340 = vpop.permute.xlu0 %2339
      %2343 = vset.pattern.permute.xlu0 0
      %2344 = vperm.xlu0 %2343, %v2190
      %v2345 = vpop.permute.xlu0 %2344
      %2348 = vset.pattern.permute.xlu0 0
      %2349 = vperm.xlu0 %2348, %v2191
      %v2350 = vpop.permute.xlu0 %2349
      %2353 = vset.pattern.permute.xlu0 0
      %2354 = vperm.xlu0 %2353, %v2192
      %v2355 = vpop.permute.xlu0 %2354
      %2358 = vset.pattern.permute.xlu0 0
      %2359 = vperm.xlu0 %2358, %v2193
      %v2360 = vpop.permute.xlu0 %2359
      %2363 = vset.pattern.permute.xlu0 0
      %2364 = vperm.xlu0 %2363, %v2194
      %v2365 = vpop.permute.xlu0 %2364
      %2368 = vset.pattern.permute.xlu0 0
      %2369 = vperm.xlu0 %2368, %v2195
      %v2370 = vpop.permute.xlu0 %2369
      %2373 = vset.pattern.permute.xlu0 0
      %2374 = vperm.xlu0 %2373, %v2196
      %v2375 = vpop.permute.xlu0 %2374
      %2378 = vset.pattern.permute.xlu0 0
      %2379 = vperm.xlu0 %2378, %v2197
      %v2380 = vpop.permute.xlu0 %2379
      %2383 = vset.pattern.permute.xlu0 0
      %2384 = vperm.xlu0 %2383, %v2198
      %v2385 = vpop.permute.xlu0 %2384
      %2388 = vset.pattern.permute.xlu0 0
      %2389 = vperm.xlu0 %2388, %v2199
      %v2390 = vpop.permute.xlu0 %2389
      %2393 = vset.pattern.permute.xlu0 0
      %2394 = vperm.xlu0 %2393, %v2200
      %v2395 = vpop.permute.xlu0 %2394
      %2398 = vset.pattern.permute.xlu0 0
      %2399 = vperm.xlu0 %2398, %v2201
      %v2400 = vpop.permute.xlu0 %2399
      %2403 = vset.pattern.permute.xlu0 0
      %2404 = vperm.xlu0 %2403, %v2202
      %v2405 = vpop.permute.xlu0 %2404
      %2408 = vset.pattern.permute.xlu0 0
      %2409 = vperm.xlu0 %2408, %v2203
      %v2410 = vpop.permute.xlu0 %2409
      %2413 = vset.pattern.permute.xlu0 0
      %2414 = vperm.xlu0 %2413, %v2204
      %v2415 = vpop.permute.xlu0 %2414
      %2418 = vset.pattern.permute.xlu0 0
      %2419 = vperm.xlu0 %2418, %v2205
      %v2420 = vpop.permute.xlu0 %2419
      %2423 = vset.pattern.permute.xlu0 0
      %2424 = vperm.xlu0 %2423, %v2206
      %v2425 = vpop.permute.xlu0 %2424
      %2428 = vset.pattern.permute.xlu0 0
      %2429 = vperm.xlu0 %2428, %v2207
      %v2430 = vpop.permute.xlu0 %2429
      %2433 = vset.pattern.permute.xlu0 0
      %2434 = vperm.xlu0 %2433, %v2208
      %v2435 = vpop.permute.xlu0 %2434
      %2438 = vset.pattern.permute.xlu0 0
      %2439 = vperm.xlu0 %2438, %v2209
      %v2440 = vpop.permute.xlu0 %2439
      %2443 = vset.pattern.permute.xlu0 0
      %2444 = vperm.xlu0 %2443, %v2210
      %v2445 = vpop.permute.xlu0 %2444
      %2448 = vset.pattern.permute.xlu0 0
      %2449 = vperm.xlu0 %2448, %v2211
      %v2450 = vpop.permute.xlu0 %2449
      %2453 = vset.pattern.permute.xlu0 0
      %2454 = vperm.xlu0 %2453, %v2212
      %v2455 = vpop.permute.xlu0 %2454
      %2458 = vset.pattern.permute.xlu0 0
      %2459 = vperm.xlu0 %2458, %v2213
      %v2460 = vpop.permute.xlu0 %2459
      %2463 = vset.pattern.permute.xlu0 0
      %2464 = vperm.xlu0 %2463, %v2214
      %v2465 = vpop.permute.xlu0 %2464
      %2468 = vset.pattern.permute.xlu0 0
      %2469 = vperm.xlu0 %2468, %v2215
      %v2470 = vpop.permute.xlu0 %2469
      %2473 = vset.pattern.permute.xlu0 0
      %2474 = vperm.xlu0 %2473, %v2216
      %v2475 = vpop.permute.xlu0 %2474
      %2478 = vset.pattern.permute.xlu0 0
      %2479 = vperm.xlu0 %2478, %v2217
      %v2480 = vpop.permute.xlu0 %2479
      %2483 = vset.pattern.permute.xlu0 0
      %2484 = vperm.xlu0 %2483, %v2218
      %v2485 = vpop.permute.xlu0 %2484
      %2488 = vset.pattern.permute.xlu0 0
      %2489 = vperm.xlu0 %2488, %v2219
      %v2490 = vpop.permute.xlu0 %2489
      %2493 = vset.pattern.permute.xlu0 0
      %2494 = vperm.xlu0 %2493, %v2220
      %v2495 = vpop.permute.xlu0 %2494
      %2498 = vset.pattern.permute.xlu0 0
      %2499 = vperm.xlu0 %2498, %v2221
      %v2500 = vpop.permute.xlu0 %2499
      %2503 = vset.pattern.permute.xlu0 0
      %2504 = vperm.xlu0 %2503, %v2222
      %v2505 = vpop.permute.xlu0 %2504
      %2508 = vset.pattern.permute.xlu0 0
      %2509 = vperm.xlu0 %2508, %v2223
      %v2510 = vpop.permute.xlu0 %2509
      %2513 = vset.pattern.permute.xlu0 0
      %2514 = vperm.xlu0 %2513, %v2224
      %v2515 = vpop.permute.xlu0 %2514
      %2518 = vset.pattern.permute.xlu0 0
      %2519 = vperm.xlu0 %2518, %v2225
      %v2520 = vpop.permute.xlu0 %2519
      %2523 = vset.pattern.permute.xlu0 0
      %2524 = vperm.xlu0 %2523, %v2226
      %v2525 = vpop.permute.xlu0 %2524
      %2528 = vset.pattern.permute.xlu0 0
      %2529 = vperm.xlu0 %2528, %v2227
      %v2530 = vpop.permute.xlu0 %2529
      %2533 = vset.pattern.permute.xlu0 0
      %2534 = vperm.xlu0 %2533, %v2228
      %v2535 = vpop.permute.xlu0 %2534
      %2538 = vset.pattern.permute.xlu0 0
      %2539 = vperm.xlu0 %2538, %v2229
      %v2540 = vpop.permute.xlu0 %2539
      %2543 = vset.pattern.permute.xlu0 0
      %2544 = vperm.xlu0 %2543, %v2230
      %v2545 = vpop.permute.xlu0 %2544
      %2548 = vset.pattern.permute.xlu0 0
      %2549 = vperm.xlu0 %2548, %v2231
      %v2550 = vpop.permute.xlu0 %2549
      %v2616 = vunpack.c.l.b16 %v2096
      %v2617 = vunpack.c.l.b16 %v2097
      %v2618 = vunpack.c.l.b16 %v2098
      %v2619 = vunpack.c.l.b16 %v2099
      %v2620 = vunpack.c.l.b16 %v2100
      %v2621 = vunpack.c.l.b16 %v2101
      %v2622 = vunpack.c.l.b16 %v2102
      %v2623 = vunpack.c.l.b16 %v2103
      %v2624 = vunpack.c.l.b16 %v2104
      %v2625 = vunpack.c.l.b16 %v2105
      %v2626 = vunpack.c.l.b16 %v2106
      %v2627 = vunpack.c.l.b16 %v2107
      %v2628 = vunpack.c.l.b16 %v2108
      %v2629 = vunpack.c.l.b16 %v2109
      %v2630 = vunpack.c.l.b16 %v2110
      %v2631 = vunpack.c.l.b16 %v2111
      %v2632 = vunpack.c.l.b16 %v2112
      %v2633 = vunpack.c.l.b16 %v2113
      %v2634 = vunpack.c.l.b16 %v2114
      %v2635 = vunpack.c.l.b16 %v2115
      %v2636 = vunpack.c.l.b16 %v2116
      %v2637 = vunpack.c.l.b16 %v2117
      %v2638 = vunpack.c.l.b16 %v2118
      %v2639 = vunpack.c.l.b16 %v2119
      %v2640 = vunpack.c.l.b16 %v2120
      %v2641 = vunpack.c.l.b16 %v2121
      %v2642 = vunpack.c.l.b16 %v2122
      %v2643 = vunpack.c.l.b16 %v2123
      %v2644 = vunpack.c.l.b16 %v2124
      %v2645 = vunpack.c.l.b16 %v2125
      %v2646 = vunpack.c.l.b16 %v2126
      %v2647 = vunpack.c.l.b16 %v2127
      %v2648 = vunpack.c.l.b16 %v2128
      %v2649 = vunpack.c.l.b16 %v2129
      %v2650 = vunpack.c.l.b16 %v2130
      %v2651 = vunpack.c.l.b16 %v2131
      %v2652 = vunpack.c.l.b16 %v2132
      %v2653 = vunpack.c.l.b16 %v2133
      %v2654 = vunpack.c.l.b16 %v2134
      %v2655 = vunpack.c.l.b16 %v2135
      %v2656 = vunpack.c.l.b16 %v2136
      %v2657 = vunpack.c.l.b16 %v2137
      %v2658 = vunpack.c.l.b16 %v2138
      %v2659 = vunpack.c.l.b16 %v2139
      %v2660 = vunpack.c.l.b16 %v2140
      %v2661 = vunpack.c.l.b16 %v2141
      %v2662 = vunpack.c.l.b16 %v2142
      %v2663 = vunpack.c.l.b16 %v2143
      %v2664 = vunpack.c.l.b16 %v2144
      %v2665 = vunpack.c.l.b16 %v2145
      %v2666 = vunpack.c.l.b16 %v2146
      %v2667 = vunpack.c.l.b16 %v2147
      %v2668 = vunpack.c.l.b16 %v2148
      %v2669 = vunpack.c.l.b16 %v2149
      %v2670 = vunpack.c.l.b16 %v2150
      %v2671 = vunpack.c.l.b16 %v2151
      %v2672 = vunpack.c.l.b16 %v2152
      %v2673 = vunpack.c.l.b16 %v2153
      %v2674 = vunpack.c.l.b16 %v2154
      %v2675 = vunpack.c.l.b16 %v2155
      %v2676 = vunpack.c.l.b16 %v2156
      %v2677 = vunpack.c.l.b16 %v2157
      %v2678 = vunpack.c.l.b16 %v2158
      %v2679 = vunpack.c.l.b16 %v2159
      %v2680 = vpack.c.b16 %v2617, %v2616
      %v2681 = vpack.c.b16 %v2619, %v2618
      %v2682 = vpack.c.b16 %v2621, %v2620
      %v2683 = vpack.c.b16 %v2623, %v2622
      %v2684 = vpack.c.b16 %v2625, %v2624
      %v2685 = vpack.c.b16 %v2627, %v2626
      %v2686 = vpack.c.b16 %v2629, %v2628
      %v2687 = vpack.c.b16 %v2631, %v2630
      %v2688 = vpack.c.b16 %v2633, %v2632
      %v2689 = vpack.c.b16 %v2635, %v2634
      %v2690 = vpack.c.b16 %v2637, %v2636
      %v2691 = vpack.c.b16 %v2639, %v2638
      %v2692 = vpack.c.b16 %v2641, %v2640
      %v2693 = vpack.c.b16 %v2643, %v2642
      %v2694 = vpack.c.b16 %v2645, %v2644
      %v2695 = vpack.c.b16 %v2647, %v2646
      %v2696 = vpack.c.b16 %v2649, %v2648
      %v2697 = vpack.c.b16 %v2651, %v2650
      %v2698 = vpack.c.b16 %v2653, %v2652
      %v2699 = vpack.c.b16 %v2655, %v2654
      %v2700 = vpack.c.b16 %v2657, %v2656
      %v2701 = vpack.c.b16 %v2659, %v2658
      %v2702 = vpack.c.b16 %v2661, %v2660
      %v2703 = vpack.c.b16 %v2663, %v2662
      %v2704 = vpack.c.b16 %v2665, %v2664
      %v2705 = vpack.c.b16 %v2667, %v2666
      %v2706 = vpack.c.b16 %v2669, %v2668
      %v2707 = vpack.c.b16 %v2671, %v2670
      %v2708 = vpack.c.b16 %v2673, %v2672
      %v2709 = vpack.c.b16 %v2675, %v2674
      %v2710 = vpack.c.b16 %v2677, %v2676
      %v2711 = vpack.c.b16 %v2679, %v2678
      %2744 = vmatpush.bf16.msra.mxu0 %v2167
      %2745 = vmatpush.bf16.msra.mxu0 %v2166
      %2746 = vmatpush.bf16.msra.mxu0 %v2165
      %2747 = vmatpush.bf16.msra.mxu0 %v2164
      %2748 = vmatpush.bf16.msra.mxu0 %v2163
      %2749 = vmatpush.bf16.msra.mxu0 %v2162
      %2750 = vmatpush.bf16.msra.mxu0 %v2161
      %2751 = vmatpush.bf16.msra.mxu0 %v2160
      %2752 = vmatmul.bf16.gmra.mxu0 %v2680
      %v2753 = vpop.f32.mrf.mxu0
      %v2754 = vadd.f32 %v2235, %v2753
      %v2755 = vpop.f32.mrf.mxu0
      %v2756 = vadd.f32 %v2240, %v2755
      %2757 = vmatmul.bf16.gmra.mxu0 %v2681
      %v2758 = vpop.f32.mrf.mxu0
      %v2759 = vadd.f32 %v2245, %v2758
      %v2760 = vpop.f32.mrf.mxu0
      %v2761 = vadd.f32 %v2250, %v2760
      %2762 = vmatmul.bf16.gmra.mxu0 %v2682
      %v2763 = vpop.f32.mrf.mxu0
      %v2764 = vadd.f32 %v2255, %v2763
      %v2765 = vpop.f32.mrf.mxu0
      %v2766 = vadd.f32 %v2260, %v2765
      %2767 = vmatmul.bf16.gmra.mxu0 %v2683
      %v2768 = vpop.f32.mrf.mxu0
      %v2769 = vadd.f32 %v2265, %v2768
      %v2770 = vpop.f32.mrf.mxu0
      %v2771 = vadd.f32 %v2270, %v2770
      %2772 = vmatmul.bf16.gmra.mxu0 %v2684
      %v2773 = vpop.f32.mrf.mxu0
      %v2774 = vadd.f32 %v2275, %v2773
      %v2775 = vpop.f32.mrf.mxu0
      %v2776 = vadd.f32 %v2280, %v2775
      %2777 = vmatmul.bf16.gmra.mxu0 %v2685
      %v2778 = vpop.f32.mrf.mxu0
      %v2779 = vadd.f32 %v2285, %v2778
      %v2780 = vpop.f32.mrf.mxu0
      %v2781 = vadd.f32 %v2290, %v2780
      %2782 = vmatmul.bf16.gmra.mxu0 %v2686
      %v2783 = vpop.f32.mrf.mxu0
      %v2784 = vadd.f32 %v2295, %v2783
      %v2785 = vpop.f32.mrf.mxu0
      %v2786 = vadd.f32 %v2300, %v2785
      %2787 = vmatmul.bf16.gmra.mxu0 %v2687
      %v2788 = vpop.f32.mrf.mxu0
      %v2789 = vadd.f32 %v2305, %v2788
      %v2790 = vpop.f32.mrf.mxu0
      %v2791 = vadd.f32 %v2310, %v2790
      %2792 = vmatmul.bf16.gmra.mxu0 %v2688
      %v2793 = vpop.f32.mrf.mxu0
      %v2794 = vadd.f32 %v2315, %v2793
      %v2795 = vpop.f32.mrf.mxu0
      %v2796 = vadd.f32 %v2320, %v2795
      %2797 = vmatmul.bf16.gmra.mxu0 %v2689
      %v2798 = vpop.f32.mrf.mxu0
      %v2799 = vadd.f32 %v2325, %v2798
      %v2800 = vpop.f32.mrf.mxu0
      %v2801 = vadd.f32 %v2330, %v2800
      %2802 = vmatmul.bf16.gmra.mxu0 %v2690
      %v2803 = vpop.f32.mrf.mxu0
      %v2804 = vadd.f32 %v2335, %v2803
      %v2805 = vpop.f32.mrf.mxu0
      %v2806 = vadd.f32 %v2340, %v2805
      %2807 = vmatmul.bf16.gmra.mxu0 %v2691
      %v2808 = vpop.f32.mrf.mxu0
      %v2809 = vadd.f32 %v2345, %v2808
      %v2810 = vpop.f32.mrf.mxu0
      %v2811 = vadd.f32 %v2350, %v2810
      %2812 = vmatmul.bf16.gmra.mxu0 %v2692
      %v2813 = vpop.f32.mrf.mxu0
      %v2814 = vadd.f32 %v2355, %v2813
      %v2815 = vpop.f32.mrf.mxu0
      %v2816 = vadd.f32 %v2360, %v2815
      %2817 = vmatmul.bf16.gmra.mxu0 %v2693
      %v2818 = vpop.f32.mrf.mxu0
      %v2819 = vadd.f32 %v2365, %v2818
      %v2820 = vpop.f32.mrf.mxu0
      %v2821 = vadd.f32 %v2370, %v2820
      %2822 = vmatmul.bf16.gmra.mxu0 %v2694
      %v2823 = vpop.f32.mrf.mxu0
      %v2824 = vadd.f32 %v2375, %v2823
      %v2825 = vpop.f32.mrf.mxu0
      %v2826 = vadd.f32 %v2380, %v2825
      %2827 = vmatmul.bf16.gmra.mxu0 %v2695
      %v2828 = vpop.f32.mrf.mxu0
      %v2829 = vadd.f32 %v2385, %v2828
      %v2830 = vpop.f32.mrf.mxu0
      %v2831 = vadd.f32 %v2390, %v2830
      %2832 = vmatmul.bf16.gmra.mxu0 %v2696
      %v2833 = vpop.f32.mrf.mxu0
      %v2834 = vadd.f32 %v2395, %v2833
      %v2835 = vpop.f32.mrf.mxu0
      %v2836 = vadd.f32 %v2400, %v2835
      %2837 = vmatmul.bf16.gmra.mxu0 %v2697
      %v2838 = vpop.f32.mrf.mxu0
      %v2839 = vadd.f32 %v2405, %v2838
      %v2840 = vpop.f32.mrf.mxu0
      %v2841 = vadd.f32 %v2410, %v2840
      %2842 = vmatmul.bf16.gmra.mxu0 %v2698
      %v2843 = vpop.f32.mrf.mxu0
      %v2844 = vadd.f32 %v2415, %v2843
      %v2845 = vpop.f32.mrf.mxu0
      %v2846 = vadd.f32 %v2420, %v2845
      %2847 = vmatmul.bf16.gmra.mxu0 %v2699
      %v2848 = vpop.f32.mrf.mxu0
      %v2849 = vadd.f32 %v2425, %v2848
      %v2850 = vpop.f32.mrf.mxu0
      %v2851 = vadd.f32 %v2430, %v2850
      %2852 = vmatmul.bf16.gmra.mxu0 %v2700
      %v2853 = vpop.f32.mrf.mxu0
      %v2854 = vadd.f32 %v2435, %v2853
      %v2855 = vpop.f32.mrf.mxu0
      %v2856 = vadd.f32 %v2440, %v2855
      %2857 = vmatmul.bf16.gmra.mxu0 %v2701
      %v2858 = vpop.f32.mrf.mxu0
      %v2859 = vadd.f32 %v2445, %v2858
      %v2860 = vpop.f32.mrf.mxu0
      %v2861 = vadd.f32 %v2450, %v2860
      %2862 = vmatmul.bf16.gmra.mxu0 %v2702
      %v2863 = vpop.f32.mrf.mxu0
      %v2864 = vadd.f32 %v2455, %v2863
      %v2865 = vpop.f32.mrf.mxu0
      %v2866 = vadd.f32 %v2460, %v2865
      %2867 = vmatmul.bf16.gmra.mxu0 %v2703
      %v2868 = vpop.f32.mrf.mxu0
      %v2869 = vadd.f32 %v2465, %v2868
      %v2870 = vpop.f32.mrf.mxu0
      %v2871 = vadd.f32 %v2470, %v2870
      %2872 = vmatmul.bf16.gmra.mxu0 %v2704
      %v2873 = vpop.f32.mrf.mxu0
      %v2874 = vadd.f32 %v2475, %v2873
      %v2875 = vpop.f32.mrf.mxu0
      %v2876 = vadd.f32 %v2480, %v2875
      %2877 = vmatmul.bf16.gmra.mxu0 %v2705
      %v2878 = vpop.f32.mrf.mxu0
      %v2879 = vadd.f32 %v2485, %v2878
      %v2880 = vpop.f32.mrf.mxu0
      %v2881 = vadd.f32 %v2490, %v2880
      %2882 = vmatmul.bf16.gmra.mxu0 %v2706
      %v2883 = vpop.f32.mrf.mxu0
      %v2884 = vadd.f32 %v2495, %v2883
      %v2885 = vpop.f32.mrf.mxu0
      %v2886 = vadd.f32 %v2500, %v2885
      %2887 = vmatmul.bf16.gmra.mxu0 %v2707
      %v2888 = vpop.f32.mrf.mxu0
      %v2889 = vadd.f32 %v2505, %v2888
      %v2890 = vpop.f32.mrf.mxu0
      %v2891 = vadd.f32 %v2510, %v2890
      %2892 = vmatmul.bf16.gmra.mxu0 %v2708
      %v2893 = vpop.f32.mrf.mxu0
      %v2894 = vadd.f32 %v2515, %v2893
      %v2895 = vpop.f32.mrf.mxu0
      %v2896 = vadd.f32 %v2520, %v2895
      %2897 = vmatmul.bf16.gmra.mxu0 %v2709
      %v2898 = vpop.f32.mrf.mxu0
      %v2899 = vadd.f32 %v2525, %v2898
      %v2900 = vpop.f32.mrf.mxu0
      %v2901 = vadd.f32 %v2530, %v2900
      %2902 = vmatmul.bf16.gmra.mxu0 %v2710
      %v2903 = vpop.f32.mrf.mxu0
      %v2904 = vadd.f32 %v2535, %v2903
      %v2905 = vpop.f32.mrf.mxu0
      %v2906 = vadd.f32 %v2540, %v2905
      %2907 = vmatmul.bf16.gmra.mxu0 %v2711
      %v2908 = vpop.f32.mrf.mxu0
      %v2909 = vadd.f32 %v2545, %v2908
      %v2910 = vpop.f32.mrf.mxu0
      %v2911 = vadd.f32 %v2550, %v2910
      %2912 = vdwg.mxu0
      %v2913 = vmax.f32 %v2754, 0.0
      %v2914 = vmax.f32 %v2756, 0.0
      %v2915 = vmax.f32 %v2759, 0.0
      %v2916 = vmax.f32 %v2761, 0.0
      %v2917 = vmax.f32 %v2764, 0.0
      %v2918 = vmax.f32 %v2766, 0.0
      %v2919 = vmax.f32 %v2769, 0.0
      %v2920 = vmax.f32 %v2771, 0.0
      %v2921 = vmax.f32 %v2774, 0.0
      %v2922 = vmax.f32 %v2776, 0.0
      %v2923 = vmax.f32 %v2779, 0.0
      %v2924 = vmax.f32 %v2781, 0.0
      %v2925 = vmax.f32 %v2784, 0.0
      %v2926 = vmax.f32 %v2786, 0.0
      %v2927 = vmax.f32 %v2789, 0.0
      %v2928 = vmax.f32 %v2791, 0.0
      %v2929 = vmax.f32 %v2794, 0.0
      %v2930 = vmax.f32 %v2796, 0.0
      %v2931 = vmax.f32 %v2799, 0.0
      %v2932 = vmax.f32 %v2801, 0.0
      %v2933 = vmax.f32 %v2804, 0.0
      %v2934 = vmax.f32 %v2806, 0.0
      %v2935 = vmax.f32 %v2809, 0.0
      %v2936 = vmax.f32 %v2811, 0.0
      %v2937 = vmax.f32 %v2814, 0.0
      %v2938 = vmax.f32 %v2816, 0.0
      %v2939 = vmax.f32 %v2819, 0.0
      %v2940 = vmax.f32 %v2821, 0.0
      %v2941 = vmax.f32 %v2824, 0.0
      %v2942 = vmax.f32 %v2826, 0.0
      %v2943 = vmax.f32 %v2829, 0.0
      %v2944 = vmax.f32 %v2831, 0.0
      %v2945 = vmax.f32 %v2834, 0.0
      %v2946 = vmax.f32 %v2836, 0.0
      %v2947 = vmax.f32 %v2839, 0.0
      %v2948 = vmax.f32 %v2841, 0.0
      %v2949 = vmax.f32 %v2844, 0.0
      %v2950 = vmax.f32 %v2846, 0.0
      %v2951 = vmax.f32 %v2849, 0.0
      %v2952 = vmax.f32 %v2851, 0.0
      %v2953 = vmax.f32 %v2854, 0.0
      %v2954 = vmax.f32 %v2856, 0.0
      %v2955 = vmax.f32 %v2859, 0.0
      %v2956 = vmax.f32 %v2861, 0.0
      %v2957 = vmax.f32 %v2864, 0.0
      %v2958 = vmax.f32 %v2866, 0.0
      %v2959 = vmax.f32 %v2869, 0.0
      %v2960 = vmax.f32 %v2871, 0.0
      %v2961 = vmax.f32 %v2874, 0.0
      %v2962 = vmax.f32 %v2876, 0.0
      %v2963 = vmax.f32 %v2879, 0.0
      %v2964 = vmax.f32 %v2881, 0.0
      %v2965 = vmax.f32 %v2884, 0.0
      %v2966 = vmax.f32 %v2886, 0.0
      %v2967 = vmax.f32 %v2889, 0.0
      %v2968 = vmax.f32 %v2891, 0.0
      %v2969 = vmax.f32 %v2894, 0.0
      %v2970 = vmax.f32 %v2896, 0.0
      %v2971 = vmax.f32 %v2899, 0.0
      %v2972 = vmax.f32 %v2901, 0.0
      %v2973 = vmax.f32 %v2904, 0.0
      %v2974 = vmax.f32 %v2906, 0.0
      %v2975 = vmax.f32 %v2909, 0.0
      %v2976 = vmax.f32 %v2911, 0.0
      %v2977 = vld [vmem:[%s9] sm:$0xff]
      %v2978 = vld [vmem:[%s9 + $0x8] sm:$0xff]
      %v2979 = vld [vmem:[%s9 + $0x10] sm:$0xff]
      %v2980 = vld [vmem:[%s9 + $0x18] sm:$0xff]
      %v2981 = vld [vmem:[%s9 + $0x20] sm:$0xff]
      %v2982 = vld [vmem:[%s9 + $0x28] sm:$0xff]
      %v2983 = vld [vmem:[%s9 + $0x30] sm:$0xff]
      %v2984 = vld [vmem:[%s9 + $0x38] sm:$0xff]
      %v2985 = vld [vmem:[%s9 + $0x40] sm:$0xff]
      %v2986 = vld [vmem:[%s9 + $0x48] sm:$0xff]
      %v2987 = vld [vmem:[%s9 + $0x50] sm:$0xff]
      %v2988 = vld [vmem:[%s9 + $0x58] sm:$0xff]
      %v2989 = vld [vmem:[%s9 + $0x60] sm:$0xff]
      %v2990 = vld [vmem:[%s9 + $0x68] sm:$0xff]
      %v2991 = vld [vmem:[%s9 + $0x70] sm:$0xff]
      %v2992 = vld [vmem:[%s9 + $0x78] sm:$0xff]
      %v2993 = vld [vmem:[%s9 + $0x80] sm:$0xff]
      %v2994 = vld [vmem:[%s9 + $0x88] sm:$0xff]
      %v2995 = vld [vmem:[%s9 + $0x90] sm:$0xff]
      %v2996 = vld [vmem:[%s9 + $0x98] sm:$0xff]
      %v2997 = vld [vmem:[%s9 + $0xa0] sm:$0xff]
      %v2998 = vld [vmem:[%s9 + $0xa8] sm:$0xff]
      %v2999 = vld [vmem:[%s9 + $0xb0] sm:$0xff]
      %v3000 = vld [vmem:[%s9 + $0xb8] sm:$0xff]
      %v3001 = vld [vmem:[%s9 + $0xc0] sm:$0xff]
      %v3002 = vld [vmem:[%s9 + $0xc8] sm:$0xff]
      %v3003 = vld [vmem:[%s9 + $0xd0] sm:$0xff]
      %v3004 = vld [vmem:[%s9 + $0xd8] sm:$0xff]
      %v3005 = vld [vmem:[%s9 + $0xe0] sm:$0xff]
      %v3006 = vld [vmem:[%s9 + $0xe8] sm:$0xff]
      %v3007 = vld [vmem:[%s9 + $0xf0] sm:$0xff]
      %v3008 = vld [vmem:[%s9 + $0xf8] sm:$0xff]
      %v3009 = vpack.c.bf16 %v2914, %v2913
      %v3010 = vpack.c.bf16 %v2916, %v2915
      %v3011 = vpack.c.bf16 %v2918, %v2917
      %v3012 = vpack.c.bf16 %v2920, %v2919
      %v3013 = vpack.c.bf16 %v2922, %v2921
      %v3014 = vpack.c.bf16 %v2924, %v2923
      %v3015 = vpack.c.bf16 %v2926, %v2925
      %v3016 = vpack.c.bf16 %v2928, %v2927
      %v3017 = vpack.c.bf16 %v2930, %v2929
      %v3018 = vpack.c.bf16 %v2932, %v2931
      %v3019 = vpack.c.bf16 %v2934, %v2933
      %v3020 = vpack.c.bf16 %v2936, %v2935
      %v3021 = vpack.c.bf16 %v2938, %v2937
      %v3022 = vpack.c.bf16 %v2940, %v2939
      %v3023 = vpack.c.bf16 %v2942, %v2941
      %v3024 = vpack.c.bf16 %v2944, %v2943
      %v3025 = vpack.c.bf16 %v2946, %v2945
      %v3026 = vpack.c.bf16 %v2948, %v2947
      %v3027 = vpack.c.bf16 %v2950, %v2949
      %v3028 = vpack.c.bf16 %v2952, %v2951
      %v3029 = vpack.c.bf16 %v2954, %v2953
      %v3030 = vpack.c.bf16 %v2956, %v2955
      %v3031 = vpack.c.bf16 %v2958, %v2957
      %v3032 = vpack.c.bf16 %v2960, %v2959
      %v3033 = vpack.c.bf16 %v2962, %v2961
      %v3034 = vpack.c.bf16 %v2964, %v2963
      %v3035 = vpack.c.bf16 %v2966, %v2965
      %v3036 = vpack.c.bf16 %v2968, %v2967
      %v3037 = vpack.c.bf16 %v2970, %v2969
      %v3038 = vpack.c.bf16 %v2972, %v2971
      %v3039 = vpack.c.bf16 %v2974, %v2973
      %v3040 = vpack.c.bf16 %v2976, %v2975
      %v3041 = vld [vmem:[%s10] sm:$0xff]
      %v3042 = vld [vmem:[%s10 + $0x8] sm:$0xff]
      %v3043 = vld [vmem:[%s10 + $0x10] sm:$0xff]
      %v3044 = vld [vmem:[%s10 + $0x18] sm:$0xff]
      %v3045 = vld [vmem:[%s10 + $0x20] sm:$0xff]
      %v3046 = vld [vmem:[%s10 + $0x28] sm:$0xff]
      %v3047 = vld [vmem:[%s10 + $0x30] sm:$0xff]
      %v3048 = vld [vmem:[%s10 + $0x38] sm:$0xff]
      %v3049 = vld [vmem:[%s10 + $0x40] sm:$0xff]
      %v3050 = vld [vmem:[%s10 + $0x48] sm:$0xff]
      %v3051 = vld [vmem:[%s10 + $0x50] sm:$0xff]
      %v3052 = vld [vmem:[%s10 + $0x58] sm:$0xff]
      %v3053 = vld [vmem:[%s10 + $0x60] sm:$0xff]
      %v3054 = vld [vmem:[%s10 + $0x68] sm:$0xff]
      %v3055 = vld [vmem:[%s10 + $0x70] sm:$0xff]
      %v3056 = vld [vmem:[%s10 + $0x78] sm:$0xff]
      %3058 = vset.pattern.permute.xlu0 0
      %3059 = vperm.xlu0 %3058, %v3041
      %v3060 = vpop.permute.xlu0 %3059
      %3063 = vset.pattern.permute.xlu0 0
      %3064 = vperm.xlu0 %3063, %v3042
      %v3065 = vpop.permute.xlu0 %3064
      %3068 = vset.pattern.permute.xlu0 0
      %3069 = vperm.xlu0 %3068, %v3043
      %v3070 = vpop.permute.xlu0 %3069
      %3073 = vset.pattern.permute.xlu0 0
      %3074 = vperm.xlu0 %3073, %v3044
      %v3075 = vpop.permute.xlu0 %3074
      %3078 = vset.pattern.permute.xlu0 0
      %3079 = vperm.xlu0 %3078, %v3045
      %v3080 = vpop.permute.xlu0 %3079
      %3083 = vset.pattern.permute.xlu0 0
      %3084 = vperm.xlu0 %3083, %v3046
      %v3085 = vpop.permute.xlu0 %3084
      %3088 = vset.pattern.permute.xlu0 0
      %3089 = vperm.xlu0 %3088, %v3047
      %v3090 = vpop.permute.xlu0 %3089
      %3093 = vset.pattern.permute.xlu0 0
      %3094 = vperm.xlu0 %3093, %v3048
      %v3095 = vpop.permute.xlu0 %3094
      %3098 = vset.pattern.permute.xlu0 0
      %3099 = vperm.xlu0 %3098, %v3049
      %v3100 = vpop.permute.xlu0 %3099
      %3103 = vset.pattern.permute.xlu0 0
      %3104 = vperm.xlu0 %3103, %v3050
      %v3105 = vpop.permute.xlu0 %3104
      %3108 = vset.pattern.permute.xlu0 0
      %3109 = vperm.xlu0 %3108, %v3051
      %v3110 = vpop.permute.xlu0 %3109
      %3113 = vset.pattern.permute.xlu0 0
      %3114 = vperm.xlu0 %3113, %v3052
      %v3115 = vpop.permute.xlu0 %3114
      %3118 = vset.pattern.permute.xlu0 0
      %3119 = vperm.xlu0 %3118, %v3053
      %v3120 = vpop.permute.xlu0 %3119
      %3123 = vset.pattern.permute.xlu0 0
      %3124 = vperm.xlu0 %3123, %v3054
      %v3125 = vpop.permute.xlu0 %3124
      %3128 = vset.pattern.permute.xlu0 0
      %3129 = vperm.xlu0 %3128, %v3055
      %v3130 = vpop.permute.xlu0 %3129
      %3133 = vset.pattern.permute.xlu0 0
      %3134 = vperm.xlu0 %3133, %v3056
      %v3135 = vpop.permute.xlu0 %3134
      %v3169 = vunpack.c.l.b16 %v2977
      %v3170 = vunpack.c.h.b16 %v2977
      %v3171 = vunpack.c.l.b16 %v2978
      %v3172 = vunpack.c.h.b16 %v2978
      %v3173 = vunpack.c.l.b16 %v2979
      %v3174 = vunpack.c.h.b16 %v2979
      %v3175 = vunpack.c.l.b16 %v2980
      %v3176 = vunpack.c.h.b16 %v2980
      %v3177 = vunpack.c.l.b16 %v2981
      %v3178 = vunpack.c.h.b16 %v2981
      %v3179 = vunpack.c.l.b16 %v2982
      %v3180 = vunpack.c.h.b16 %v2982
      %v3181 = vunpack.c.l.b16 %v2983
      %v3182 = vunpack.c.h.b16 %v2983
      %v3183 = vunpack.c.l.b16 %v2984
      %v3184 = vunpack.c.h.b16 %v2984
      %v3185 = vunpack.c.l.b16 %v2985
      %v3186 = vunpack.c.h.b16 %v2985
      %v3187 = vunpack.c.l.b16 %v2986
      %v3188 = vunpack.c.h.b16 %v2986
      %v3189 = vunpack.c.l.b16 %v2987
      %v3190 = vunpack.c.h.b16 %v2987
      %v3191 = vunpack.c.l.b16 %v2988
      %v3192 = vunpack.c.h.b16 %v2988
      %v3193 = vunpack.c.l.b16 %v2989
      %v3194 = vunpack.c.h.b16 %v2989
      %v3195 = vunpack.c.l.b16 %v2990
      %v3196 = vunpack.c.h.b16 %v2990
      %v3197 = vunpack.c.l.b16 %v2991
      %v3198 = vunpack.c.h.b16 %v2991
      %v3199 = vunpack.c.l.b16 %v2992
      %v3200 = vunpack.c.h.b16 %v2992
      %v3201 = vunpack.c.l.b16 %v2993
      %v3202 = vunpack.c.h.b16 %v2993
      %v3203 = vunpack.c.l.b16 %v2994
      %v3204 = vunpack.c.h.b16 %v2994
      %v3205 = vunpack.c.l.b16 %v2995
      %v3206 = vunpack.c.h.b16 %v2995
      %v3207 = vunpack.c.l.b16 %v2996
      %v3208 = vunpack.c.h.b16 %v2996
      %v3209 = vunpack.c.l.b16 %v2997
      %v3210 = vunpack.c.h.b16 %v2997
      %v3211 = vunpack.c.l.b16 %v2998
      %v3212 = vunpack.c.h.b16 %v2998
      %v3213 = vunpack.c.l.b16 %v2999
      %v3214 = vunpack.c.h.b16 %v2999
      %v3215 = vunpack.c.l.b16 %v3000
      %v3216 = vunpack.c.h.b16 %v3000
      %v3217 = vunpack.c.l.b16 %v3001
      %v3218 = vunpack.c.h.b16 %v3001
      %v3219 = vunpack.c.l.b16 %v3002
      %v3220 = vunpack.c.h.b16 %v3002
      %v3221 = vunpack.c.l.b16 %v3003
      %v3222 = vunpack.c.h.b16 %v3003
      %v3223 = vunpack.c.l.b16 %v3004
      %v3224 = vunpack.c.h.b16 %v3004
      %v3225 = vunpack.c.l.b16 %v3005
      %v3226 = vunpack.c.h.b16 %v3005
      %v3227 = vunpack.c.l.b16 %v3006
      %v3228 = vunpack.c.h.b16 %v3006
      %v3229 = vunpack.c.l.b16 %v3007
      %v3230 = vunpack.c.h.b16 %v3007
      %v3231 = vunpack.c.l.b16 %v3008
      %v3232 = vunpack.c.h.b16 %v3008
      %v3233 = vpack.c.b16 %v3173, %v3169
      %v3234 = vpack.c.b16 %v3174, %v3170
      %v3235 = vpack.c.b16 %v3175, %v3171
      %v3236 = vpack.c.b16 %v3176, %v3172
      %v3237 = vpack.c.b16 %v3181, %v3177
      %v3238 = vpack.c.b16 %v3182, %v3178
      %v3239 = vpack.c.b16 %v3183, %v3179
      %v3240 = vpack.c.b16 %v3184, %v3180
      %v3241 = vpack.c.b16 %v3189, %v3185
      %v3242 = vpack.c.b16 %v3190, %v3186
      %v3243 = vpack.c.b16 %v3191, %v3187
      %v3244 = vpack.c.b16 %v3192, %v3188
      %v3245 = vpack.c.b16 %v3197, %v3193
      %v3246 = vpack.c.b16 %v3198, %v3194
      %v3247 = vpack.c.b16 %v3199, %v3195
      %v3248 = vpack.c.b16 %v3200, %v3196
      %v3249 = vpack.c.b16 %v3205, %v3201
      %v3250 = vpack.c.b16 %v3206, %v3202
      %v3251 = vpack.c.b16 %v3207, %v3203
      %v3252 = vpack.c.b16 %v3208, %v3204
      %v3253 = vpack.c.b16 %v3213, %v3209
      %v3254 = vpack.c.b16 %v3214, %v3210
      %v3255 = vpack.c.b16 %v3215, %v3211
      %v3256 = vpack.c.b16 %v3216, %v3212
      %v3257 = vpack.c.b16 %v3221, %v3217
      %v3258 = vpack.c.b16 %v3222, %v3218
      %v3259 = vpack.c.b16 %v3223, %v3219
      %v3260 = vpack.c.b16 %v3224, %v3220
      %v3261 = vpack.c.b16 %v3229, %v3225
      %v3262 = vpack.c.b16 %v3230, %v3226
      %v3263 = vpack.c.b16 %v3231, %v3227
      %v3264 = vpack.c.b16 %v3232, %v3228
      %3297 = vmatpush.bf16.msra.mxu0 %v3016
      %3298 = vmatpush.bf16.msra.mxu0 %v3015
      %3299 = vmatpush.bf16.msra.mxu0 %v3014
      %3300 = vmatpush.bf16.msra.mxu0 %v3013
      %3301 = vmatpush.bf16.msra.mxu0 %v3012
      %3302 = vmatpush.bf16.msra.mxu0 %v3011
      %3303 = vmatpush.bf16.msra.mxu0 %v3010
      %3304 = vmatpush.bf16.msra.mxu0 %v3009
      %3305 = vmatmul.bf16.gmra.mxu0 %v3233
      %v3306 = vpop.f32.mrf.mxu0
      %v3307 = vadd.f32 %v3060, %v3306
      %v3308 = vpop.f32.mrf.mxu0
      %v3309 = vadd.f32 %v3065, %v3308
      %3310 = vmatmul.bf16.gmra.mxu0 %v3237
      %v3311 = vpop.f32.mrf.mxu0
      %v3312 = vadd.f32 %v3070, %v3311
      %v3313 = vpop.f32.mrf.mxu0
      %v3314 = vadd.f32 %v3075, %v3313
      %3315 = vmatmul.bf16.gmra.mxu0 %v3241
      %v3316 = vpop.f32.mrf.mxu0
      %v3317 = vadd.f32 %v3080, %v3316
      %v3318 = vpop.f32.mrf.mxu0
      %v3319 = vadd.f32 %v3085, %v3318
      %3320 = vmatmul.bf16.gmra.mxu0 %v3245
      %v3321 = vpop.f32.mrf.mxu0
      %v3322 = vadd.f32 %v3090, %v3321
      %v3323 = vpop.f32.mrf.mxu0
      %v3324 = vadd.f32 %v3095, %v3323
      %3325 = vmatmul.bf16.gmra.mxu0 %v3249
      %v3326 = vpop.f32.mrf.mxu0
      %v3327 = vadd.f32 %v3100, %v3326
      %v3328 = vpop.f32.mrf.mxu0
      %v3329 = vadd.f32 %v3105, %v3328
      %3330 = vmatmul.bf16.gmra.mxu0 %v3253
      %v3331 = vpop.f32.mrf.mxu0
      %v3332 = vadd.f32 %v3110, %v3331
      %v3333 = vpop.f32.mrf.mxu0
      %v3334 = vadd.f32 %v3115, %v3333
      %3335 = vmatmul.bf16.gmra.mxu0 %v3257
      %v3336 = vpop.f32.mrf.mxu0
      %v3337 = vadd.f32 %v3120, %v3336
      %v3338 = vpop.f32.mrf.mxu0
      %v3339 = vadd.f32 %v3125, %v3338
      %3340 = vmatmul.bf16.gmra.mxu0 %v3261
      %v3341 = vpop.f32.mrf.mxu0
      %v3342 = vadd.f32 %v3130, %v3341
      %v3343 = vpop.f32.mrf.mxu0
      %v3344 = vadd.f32 %v3135, %v3343
      %3345 = vdwg.mxu0
      %3346 = vmatpush.bf16.msra.mxu0 %v3024
      %3347 = vmatpush.bf16.msra.mxu0 %v3023
      %3348 = vmatpush.bf16.msra.mxu0 %v3022
      %3349 = vmatpush.bf16.msra.mxu0 %v3021
      %3350 = vmatpush.bf16.msra.mxu0 %v3020
      %3351 = vmatpush.bf16.msra.mxu0 %v3019
      %3352 = vmatpush.bf16.msra.mxu0 %v3018
      %3353 = vmatpush.bf16.msra.mxu0 %v3017
      %3354 = vmatmul.bf16.gmra.mxu0 %v3234
      %v3355 = vpop.f32.mrf.mxu0
      %v3356 = vadd.f32 %v3307, %v3355
      %v3357 = vpop.f32.mrf.mxu0
      %v3358 = vadd.f32 %v3309, %v3357
      %3359 = vmatmul.bf16.gmra.mxu0 %v3238
      %v3360 = vpop.f32.mrf.mxu0
      %v3361 = vadd.f32 %v3312, %v3360
      %v3362 = vpop.f32.mrf.mxu0
      %v3363 = vadd.f32 %v3314, %v3362
      %3364 = vmatmul.bf16.gmra.mxu0 %v3242
      %v3365 = vpop.f32.mrf.mxu0
      %v3366 = vadd.f32 %v3317, %v3365
      %v3367 = vpop.f32.mrf.mxu0
      %v3368 = vadd.f32 %v3319, %v3367
      %3369 = vmatmul.bf16.gmra.mxu0 %v3246
      %v3370 = vpop.f32.mrf.mxu0
      %v3371 = vadd.f32 %v3322, %v3370
      %v3372 = vpop.f32.mrf.mxu0
      %v3373 = vadd.f32 %v3324, %v3372
      %3374 = vmatmul.bf16.gmra.mxu0 %v3250
      %v3375 = vpop.f32.mrf.mxu0
      %v3376 = vadd.f32 %v3327, %v3375
      %v3377 = vpop.f32.mrf.mxu0
      %v3378 = vadd.f32 %v3329, %v3377
      %3379 = vmatmul.bf16.gmra.mxu0 %v3254
      %v3380 = vpop.f32.mrf.mxu0
      %v3381 = vadd.f32 %v3332, %v3380
      %v3382 = vpop.f32.mrf.mxu0
      %v3383 = vadd.f32 %v3334, %v3382
      %3384 = vmatmul.bf16.gmra.mxu0 %v3258
      %v3385 = vpop.f32.mrf.mxu0
      %v3386 = vadd.f32 %v3337, %v3385
      %v3387 = vpop.f32.mrf.mxu0
      %v3388 = vadd.f32 %v3339, %v3387
      %3389 = vmatmul.bf16.gmra.mxu0 %v3262
      %v3390 = vpop.f32.mrf.mxu0
      %v3391 = vadd.f32 %v3342, %v3390
      %v3392 = vpop.f32.mrf.mxu0
      %v3393 = vadd.f32 %v3344, %v3392
      %3394 = vdwg.mxu0
      %3395 = vmatpush.bf16.msra.mxu0 %v3032
      %3396 = vmatpush.bf16.msra.mxu0 %v3031
      %3397 = vmatpush.bf16.msra.mxu0 %v3030
      %3398 = vmatpush.bf16.msra.mxu0 %v3029
      %3399 = vmatpush.bf16.msra.mxu0 %v3028
      %3400 = vmatpush.bf16.msra.mxu0 %v3027
      %3401 = vmatpush.bf16.msra.mxu0 %v3026
      %3402 = vmatpush.bf16.msra.mxu0 %v3025
      %3403 = vmatmul.bf16.gmra.mxu0 %v3235
      %v3404 = vpop.f32.mrf.mxu0
      %v3405 = vadd.f32 %v3356, %v3404
      %v3406 = vpop.f32.mrf.mxu0
      %v3407 = vadd.f32 %v3358, %v3406
      %3408 = vmatmul.bf16.gmra.mxu0 %v3239
      %v3409 = vpop.f32.mrf.mxu0
      %v3410 = vadd.f32 %v3361, %v3409
      %v3411 = vpop.f32.mrf.mxu0
      %v3412 = vadd.f32 %v3363, %v3411
      %3413 = vmatmul.bf16.gmra.mxu0 %v3243
      %v3414 = vpop.f32.mrf.mxu0
      %v3415 = vadd.f32 %v3366, %v3414
      %v3416 = vpop.f32.mrf.mxu0
      %v3417 = vadd.f32 %v3368, %v3416
      %3418 = vmatmul.bf16.gmra.mxu0 %v3247
      %v3419 = vpop.f32.mrf.mxu0
      %v3420 = vadd.f32 %v3371, %v3419
      %v3421 = vpop.f32.mrf.mxu0
      %v3422 = vadd.f32 %v3373, %v3421
      %3423 = vmatmul.bf16.gmra.mxu0 %v3251
      %v3424 = vpop.f32.mrf.mxu0
      %v3425 = vadd.f32 %v3376, %v3424
      %v3426 = vpop.f32.mrf.mxu0
      %v3427 = vadd.f32 %v3378, %v3426
      %3428 = vmatmul.bf16.gmra.mxu0 %v3255
      %v3429 = vpop.f32.mrf.mxu0
      %v3430 = vadd.f32 %v3381, %v3429
      %v3431 = vpop.f32.mrf.mxu0
      %v3432 = vadd.f32 %v3383, %v3431
      %3433 = vmatmul.bf16.gmra.mxu0 %v3259
      %v3434 = vpop.f32.mrf.mxu0
      %v3435 = vadd.f32 %v3386, %v3434
      %v3436 = vpop.f32.mrf.mxu0
      %v3437 = vadd.f32 %v3388, %v3436
      %3438 = vmatmul.bf16.gmra.mxu0 %v3263
      %v3439 = vpop.f32.mrf.mxu0
      %v3440 = vadd.f32 %v3391, %v3439
      %v3441 = vpop.f32.mrf.mxu0
      %v3442 = vadd.f32 %v3393, %v3441
      %3443 = vdwg.mxu0
      %3444 = vmatpush.bf16.msra.mxu0 %v3040
      %3445 = vmatpush.bf16.msra.mxu0 %v3039
      %3446 = vmatpush.bf16.msra.mxu0 %v3038
      %3447 = vmatpush.bf16.msra.mxu0 %v3037
      %3448 = vmatpush.bf16.msra.mxu0 %v3036
      %3449 = vmatpush.bf16.msra.mxu0 %v3035
      %3450 = vmatpush.bf16.msra.mxu0 %v3034
      %3451 = vmatpush.bf16.msra.mxu0 %v3033
      %3452 = vmatmul.bf16.gmra.mxu0 %v3236
      %v3453 = vpop.f32.mrf.mxu0
      %v3454 = vadd.f32 %v3405, %v3453
      %v3455 = vpop.f32.mrf.mxu0
      %v3456 = vadd.f32 %v3407, %v3455
      %3457 = vmatmul.bf16.gmra.mxu0 %v3240
      %v3458 = vpop.f32.mrf.mxu0
      %v3459 = vadd.f32 %v3410, %v3458
      %v3460 = vpop.f32.mrf.mxu0
      %v3461 = vadd.f32 %v3412, %v3460
      %3462 = vmatmul.bf16.gmra.mxu0 %v3244
      %v3463 = vpop.f32.mrf.mxu0
      %v3464 = vadd.f32 %v3415, %v3463
      %v3465 = vpop.f32.mrf.mxu0
      %v3466 = vadd.f32 %v3417, %v3465
      %3467 = vmatmul.bf16.gmra.mxu0 %v3248
      %v3468 = vpop.f32.mrf.mxu0
      %v3469 = vadd.f32 %v3420, %v3468
      %v3470 = vpop.f32.mrf.mxu0
      %v3471 = vadd.f32 %v3422, %v3470
      %3472 = vmatmul.bf16.gmra.mxu0 %v3252
      %v3473 = vpop.f32.mrf.mxu0
      %v3474 = vadd.f32 %v3425, %v3473
      %v3475 = vpop.f32.mrf.mxu0
      %v3476 = vadd.f32 %v3427, %v3475
      %3477 = vmatmul.bf16.gmra.mxu0 %v3256
      %v3478 = vpop.f32.mrf.mxu0
      %v3479 = vadd.f32 %v3430, %v3478
      %v3480 = vpop.f32.mrf.mxu0
      %v3481 = vadd.f32 %v3432, %v3480
      %3482 = vmatmul.bf16.gmra.mxu0 %v3260
      %v3483 = vpop.f32.mrf.mxu0
      %v3484 = vadd.f32 %v3435, %v3483
      %v3485 = vpop.f32.mrf.mxu0
      %v3486 = vadd.f32 %v3437, %v3485
      %3487 = vmatmul.bf16.gmra.mxu0 %v3264
      %v3488 = vpop.f32.mrf.mxu0
      %v3489 = vadd.f32 %v3440, %v3488
      %v3490 = vpop.f32.mrf.mxu0
      %v3491 = vadd.f32 %v3442, %v3490
      %3492 = vdwg.mxu0
      %3493 = vst [vmem:[%s417] sm:$0xff] %v3454
      %3494 = vst [vmem:[%s417 + $0x8] sm:$0xff] %v3456
      %3495 = vst [vmem:[%s417 + $0x10] sm:$0xff] %v3459
      %3496 = vst [vmem:[%s417 + $0x18] sm:$0xff] %v3461
      %3497 = vst [vmem:[%s417 + $0x20] sm:$0xff] %v3464
      %3498 = vst [vmem:[%s417 + $0x28] sm:$0xff] %v3466
      %3499 = vst [vmem:[%s417 + $0x30] sm:$0xff] %v3469
      %3500 = vst [vmem:[%s417 + $0x38] sm:$0xff] %v3471
      %3501 = vst [vmem:[%s417 + $0x40] sm:$0xff] %v3474
      %3502 = vst [vmem:[%s417 + $0x48] sm:$0xff] %v3476
      %3503 = vst [vmem:[%s417 + $0x50] sm:$0xff] %v3479
      %3504 = vst [vmem:[%s417 + $0x58] sm:$0xff] %v3481
      %3505 = vst [vmem:[%s417 + $0x60] sm:$0xff] %v3484
      %3506 = vst [vmem:[%s417 + $0x68] sm:$0xff] %v3486
      %3507 = vst [vmem:[%s417 + $0x70] sm:$0xff] %v3489
      %3508 = vst [vmem:[%s417 + $0x78] sm:$0xff] %v3491
      %p3509 = scmp.lt.s32.totalorder %s26, 1
      %s3510 = scalar_select %p3509, %s26, 1
      %p3511 = scmp.lt.s32.totalorder %s27, 0
      %s3512 = scalar_select %p3511, %s27, 0
      %s3513 = smul.addr %s3510, 16
      %s3514 = sadd.s32 %s3512, %s3513
      %s3515 = smul.addr %s3514, 8
      %s3516 = scalar_lea.vmem %s11, %s3515
      // Predicated region
      $region65: #{qrets_forward.1} parent=63 // pred_check
        %p3517 = pneg %p292
      $region66: #{qrets_forward.1} parent=63 // pred_check_branch
        %3519 = sbr.rel (%p3517) target = $region68
      $region67: #{qrets_forward.1} parent=63 // pred_region
        _
      $region68: #{qrets_forward.1} parent=63 // pred_fallthru
        _
    $region64: #{qrets_forward.1} parent=5 // pred_fallthru
      _
    %p3520 = scmp.le.s32.totalorder 2, %s17
    // Predicated region
    $region69: #{qrets_forward.1} parent=5 // pred_check
      %p3521 = pneg %p3520
    $region70: #{qrets_forward.1} parent=5 // pred_check_branch
      %3523 = sbr.rel (%p3521) target = $region72
    $region71: #{qrets_forward.1} parent=5 // pred_region
      %s3524 = ssub.s32 %s17, 2
      // Predicated region
      $region73: #{qrets_forward.1} parent=71 // pred_check
        %p3525 = pneg %p298
      $region74: #{qrets_forward.1} parent=71 // pred_check_branch
        %3527 = sbr.rel (%p3525) target = $region76
      $region75: #{qrets_forward.1} parent=71 // pred_region
        %p3528 = scmp.lt.s32.totalorder %s28, 1
        %s3529 = scalar_select %p3528, %s28, 1
        %p3530 = scmp.lt.s32.totalorder %s29, 0
        %s3531 = scalar_select %p3530, %s29, 0
        %s3532 = smul.addr %s3529, 16
        %s3533 = sadd.s32 %s3531, %s3532
        %s3534 = smul.addr %s3533, 8
        %s3535 = scalar_lea.vmem %s11, %s3534
      $region76: #{qrets_forward.1} parent=71 // pred_fallthru
        _
    $region72: #{qrets_forward.1} parent=5 // pred_fallthru
      _
  $region6: #{qrets_forward.1} parent=0 // loop_footer
    %s21 = sadd.s32 1, %s17
  $region7: #{qrets_forward.1} parent=0 // loop_footer_branch
    %16 = sbr.rel target = $region3
  $region8: #{qrets_forward.1} parent=0 // loop_exit
    _

</llo_original>
